<compile_context>
chip_gen: v7x
topology: tpu7x:2x2x1
jax: 0.10.0
libtpu: 0.0.40
codegen_flags: <defaults>
</compile_context>

<pallas_src>
import jax
import jax.numpy as jnp
from jax.experimental import pallas as pl
from jax.experimental.pallas import tpu as pltpu


# --------------------------- helpers (in-kernel) --------------------------- #
def _layer_norm(y, gamma, beta, eps=1e-5):
    """Fused single-pass LayerNorm over the last axis (fp32 statistics)."""
    inv_d = 1.0 / y.shape[-1]
    mu = jnp.sum(y, axis=-1, keepdims=True) * inv_d
    ms = jnp.sum(y * y, axis=-1, keepdims=True) * inv_d
    rstd = jax.lax.rsqrt(ms - mu * mu + eps)
    return (y - mu) * rstd * gamma + beta


# ----------------------------- Pallas kernel ------------------------------ #
def transformer_block_kernel(
    x_ref,        # (1, S, D)   f32
    wq_ref,       # (H, D, dk)  bf16  (1/sqrt(dk) folded in)
    wk_ref,       # (H, D, dk)  bf16
    wv_ref,       # (H, D, dk)  bf16
    wo_ref,       # (H, dk, D)  bf16
    bo_ref,       # (1, D)      f32
    g1_ref,       # (1, D)      f32   LayerNorm1 gamma
    be1_ref,      # (1, D)      f32   LayerNorm1 beta
    w1_ref,       # (D, F)      bf16  FFN first linear
    b1_ref,       # (1, F)      f32
    w2_ref,       # (F, D)      bf16  FFN second linear
    b2_ref,       # (1, D)      f32
    g2_ref,       # (1, D)      f32   LayerNorm2 gamma
    be2_ref,      # (1, D)      f32   LayerNorm2 beta
    o_ref,        # (1, tq, D)  f32
    k_scratch,    # (H, S, dk)  bf16  — cached K for the whole sequence
    v_scratch,    # (H, S, dk)  bf16  — cached V for the whole sequence
):
    qi = pl.program_id(1)
    _, S, D = x_ref.shape
    H, _, dk = wq_ref.shape
    tq = o_ref.shape[1]
    bf16 = jnp.bfloat16
    f32 = jnp.float32

    # ---- K / V projection for the full sequence, once per batch ----------
    @pl.when(qi == 0)
    def _():
        xb = jnp.broadcast_to(x_ref[0].astype(bf16), (H, S, D))
        k_scratch[...] = jnp.einsum(
            "hsd,hdk->hsk", xb, wk_ref[...],
            preferred_element_type=f32).astype(bf16)
        v_scratch[...] = jnp.einsum(
            "hsd,hdk->hsk", xb, wv_ref[...],
            preferred_element_type=f32).astype(bf16)

    # ---- current query tile ----------------------------------------------
    q_start = pl.multiple_of(qi * tq, tq)
    x_q = x_ref[0, pl.ds(q_start, tq), :]                  # (tq, D) f32
    xq_b = jnp.broadcast_to(x_q.astype(bf16), (H, tq, D))

    # Q projection (scale already folded into wq); bf16 in, f32 accumulate.
    q3 = jnp.einsum("hsd,hdk->hsk", xq_b, wq_ref[...],
                    preferred_element_type=f32).astype(bf16)      # (H, tq, dk)

    # ---- attention: scores + softmax (fp32 stats) + context ---------------
    scores = jnp.einsum("hqd,hkd->hqk", q3, k_scratch[...],
                        preferred_element_type=f32)               # (H, tq, S)
    m = jnp.max(scores, axis=-1, keepdims=True)
    p = jnp.exp(scores - m)
    denom = jnp.sum(p, axis=-1, keepdims=True)
    p = p * pl.reciprocal(denom, approx=True)
    # TODO(synk): attention mask not implemented; attn-dropout = identity.

    ctx = jnp.einsum("hqk,hkd->hqd", p.astype(bf16), v_scratch[...],
                     preferred_element_type=f32)                  # (H, tq, dk)

    # Output projection: per-head matmul then sum over heads == concat @ Wo.
    attn = jnp.einsum("hqd,hdn->hqn", ctx.astype(bf16), wo_ref[...],
                      preferred_element_type=f32)                 # (H, tq, D)
    attn = jnp.sum(attn, axis=0) + bo_ref[...]                    # (tq, D)

    # ---- residual + LayerNorm 1 -------------------------------------------
    y = _layer_norm(x_q + attn, g1_ref[...], be1_ref[...])

    # ---- FFN: Linear -> ReLU -> Linear (dropouts are identity) ------------
    h1 = jnp.dot(y.astype(bf16), w1_ref[...],
                 preferred_element_type=f32) + b1_ref[...]
    h1 = jnp.maximum(h1, 0.0)
    ffn = jnp.dot(h1.astype(bf16), w2_ref[...],
                  preferred_element_type=f32) + b2_ref[...]

    # ---- residual + LayerNorm 2 -------------------------------------------
    o_ref[0] = _layer_norm(y + ffn, g2_ref[...], be2_ref[...])


# ------------------------------ wrapper ----------------------------------- #
def transformer_block(x, params, num_heads, *, q_tile=None):
    """x: (B, S, D) float32; params: dict of fp32 weights (see init_params)."""
    B, S, D = x.shape
    F = params["w1"].shape[1]
    H = num_heads
    dk = D // H
    bf16 = jnp.bfloat16

    if q_tile is None:
        q_tile = S if S <= 512 else 512
    assert S % q_tile == 0, "seq_len must be divisible by the query tile"
    num_q = S // q_tile

    # --- wrapper-side layout plumbing: head-major bf16 weights -------------
    scale = dk ** -0.5
    wq_h = jnp.swapaxes((params["wq"] * scale).reshape(D, H, dk), 0, 1).astype(bf16)
    wk_h = jnp.swapaxes(params["wk"].reshape(D, H, dk), 0, 1).astype(bf16)
    wv_h = jnp.swapaxes(params["wv"].reshape(D, H, dk), 0, 1).astype(bf16)
    wo_h = params["wo"].reshape(H, dk, D).astype(bf16)
    w1_b = params["w1"].astype(bf16)
    w2_b = params["w2"].astype(bf16)

    rep2 = lambda shape: pl.BlockSpec(shape, lambda b, qi: (0, 0))
    rep3 = lambda shape: pl.BlockSpec(shape, lambda b, qi: (0, 0, 0))

    grid_spec = pltpu.PrefetchScalarGridSpec(
        num_scalar_prefetch=0,
        grid=(B, num_q),
        in_specs=[
            pl.BlockSpec((1, S, D), lambda b, qi: (b, 0, 0)),   # x (full seq / batch)
            rep3((H, D, dk)),                                   # wq (head-major)
            rep3((H, D, dk)),                                   # wk
            rep3((H, D, dk)),                                   # wv
            rep3((H, dk, D)),                                   # wo
            rep2((1, D)),                                       # bo
            rep2((1, D)), rep2((1, D)),                         # ln1 gamma / beta
            rep2((D, F)), rep2((1, F)),                         # w1, b1
            rep2((F, D)), rep2((1, D)),                         # w2, b2
            rep2((1, D)), rep2((1, D)),                         # ln2 gamma / beta
        ],
        out_specs=pl.BlockSpec((1, q_tile, D), lambda b, qi: (b, qi, 0)),
        scratch_shapes=[
            pltpu.VMEM((H, S, dk), bf16),                       # K cache
            pltpu.VMEM((H, S, dk), bf16),                       # V cache
        ],
    )

    # --- explicit VMEM budget (double-buffered blocks + intermediates) -----
    BYTES_BF16, BYTES_F32 = 2, 4
    weight_bytes = (4 * D * D + 2 * D * F) * BYTES_BF16
    small_bytes = (6 * D + F) * BYTES_F32
    block_bytes = (S * D + q_tile * D) * BYTES_F32
    scratch_bytes = 2 * H * S * dk * BYTES_BF16
    interm_bytes = (2 * H * q_tile * S * BYTES_F32            # scores, probs
                    + H * q_tile * D * BYTES_F32              # per-head attn out
                    + 2 * q_tile * F * BYTES_F32              # FFN hidden
                    + 8 * q_tile * D * BYTES_F32)             # residual/LN temps
    est = 2 * (weight_bytes + small_bytes + block_bytes) + scratch_bytes + interm_bytes
    vmem_limit = int(min(64 * 1024 * 1024, max(32 * 1024 * 1024, est + (4 << 20))))

    return pl.pallas_call(
        transformer_block_kernel,
        out_shape=jax.ShapeDtypeStruct((B, S, D), jnp.float32),
        grid_spec=grid_spec,
        compiler_params=pltpu.CompilerParams(
            dimension_semantics=("parallel", "arbitrary"),
            vmem_limit_bytes=vmem_limit,
        ),
    )(
        x,
        wq_h, wk_h, wv_h, wo_h, params["bo"],
        params["g1"], params["be1"],
        w1_b, params["b1"], w2_b, params["b2"],
        params["g2"], params["be2"],
    )


# --------------------- deterministic parameter init ----------------------- #
def xavier_uniform(key, fan_in, fan_out):
    # torch xavier_uniform_ on weight (out, in); returned pre-transposed to
    # (in, out) so the kernel computes y = x @ W.
    bound = (6.0 / (fan_in + fan_out)) ** 0.5
    return jax.random.uniform(key, (fan_in, fan_out), jnp.float32, -bound, bound)


def init_params(key, d_model, d_ff):
    ks = jax.random.split(key, 8)
    return {
        "wq": xavier_uniform(ks[0], d_model, d_model),
        "wk": xavier_uniform(ks[1], d_model, d_model),
        "wv": xavier_uniform(ks[2], d_model, d_model),
        "wo": xavier_uniform(ks[3], d_model, d_model),
        "bo": jnp.zeros((1, d_model), jnp.float32),
        "g1": jnp.ones((1, d_model), jnp.float32),
        "be1": jnp.zeros((1, d_model), jnp.float32),
        "w1": xavier_uniform(ks[4], d_model, d_ff),
        "b1": jax.random.uniform(ks[5], (1, d_ff), jnp.float32, -0.1, 0.1),
        "w2": xavier_uniform(ks[6], d_ff, d_model),
        "b2": jax.random.uniform(ks[7], (1, d_model), jnp.float32, -0.1, 0.1),
        "g2": jnp.ones((1, d_model), jnp.float32),
        "be2": jnp.zeros((1, d_model), jnp.float32),
    }


# ------------------------- pure-JAX fp32 reference ------------------------- #
def reference_block(x, p, num_heads):
    B, S, D = x.shape
    d_k = D // num_heads
    eps = 1e-5

    def ln(v, g, b):
        mu = jnp.mean(v, -1, keepdims=True)
        var = jnp.mean((v - mu) ** 2, -1, keepdims=True)
        return (v - mu) / jnp.sqrt(var + eps) * g + b

    q = (x @ p["wq"]).reshape(B, S, num_heads, d_k).transpose(0, 2, 1, 3)
    k = (x @ p["wk"]).reshape(B, S, num_heads, d_k).transpose(0, 2, 1, 3)
    v = (x @ p["wv"]).reshape(B, S, num_heads, d_k).transpose(0, 2, 1, 3)
    scores = jnp.einsum("bhqd,bhkd->bhqk", q, k) * d_k ** -0.5
    attn = jax.nn.softmax(scores, axis=-1)
    ctx = jnp.einsum("bhqk,bhkd->bhqd", attn, v).transpose(0, 2, 1, 3).reshape(B, S, D)
    attn_out = ctx @ p["wo"] + p["bo"]
    y = ln(x + attn_out, p["g1"], p["be1"])
    f = jnp.maximum(y @ p["w1"] + p["b1"], 0.0) @ p["w2"] + p["b2"]
    return ln(y + f, p["g2"], p["be2"])


if __name__ == "__main__":
    d_model, num_heads, d_ff = 32, 4, 64
    B, S = 2, 8

    key = jax.random.PRNGKey(0)
    kx, kp = jax.random.split(key)
    x = jax.random.normal(kx, (B, S, d_model), jnp.float32)
    params = init_params(kp, d_model, d_ff)

    out = transformer_block(x, params, num_heads)
    out = jax.block_until_ready(out)

    ref = reference_block(x, params, num_heads)
    assert out.shape == (B, S, d_model)
    # bf16 MXU operands (fp32 accumulation) => loosened tolerance vs fp32 ref.
    assert jnp.allclose(out, ref, atol=5e-2, rtol=5e-2), "mismatch vs reference"

    print("KERNEL_OK")
</pallas_src>

<mosaic_0001>
module attributes {stable_mosaic.version = 11 : i64} {
  func.func @transformer_block_kernel(%arg0: i32, %arg1: i32, %arg2: memref<1x8x32xf32, #tpu.memory_space<vmem>>, %arg3: memref<4x32x8xbf16, #tpu.memory_space<vmem>>, %arg4: memref<4x32x8xbf16, #tpu.memory_space<vmem>>, %arg5: memref<4x32x8xbf16, #tpu.memory_space<vmem>>, %arg6: memref<4x8x32xbf16, #tpu.memory_space<vmem>>, %arg7: memref<1x32xf32, #tpu.memory_space<vmem>>, %arg8: memref<1x32xf32, #tpu.memory_space<vmem>>, %arg9: memref<1x32xf32, #tpu.memory_space<vmem>>, %arg10: memref<32x64xbf16, #tpu.memory_space<vmem>>, %arg11: memref<1x64xf32, #tpu.memory_space<vmem>>, %arg12: memref<64x32xbf16, #tpu.memory_space<vmem>>, %arg13: memref<1x32xf32, #tpu.memory_space<vmem>>, %arg14: memref<1x32xf32, #tpu.memory_space<vmem>>, %arg15: memref<1x32xf32, #tpu.memory_space<vmem>>, %arg16: memref<1x8x32xf32, #tpu.memory_space<vmem>>, %arg17: memref<4x8x8xbf16, #tpu.memory_space<vmem>>, %arg18: memref<4x8x8xbf16, #tpu.memory_space<vmem>>) attributes {dimension_semantics = [#tpu.dimension_semantics<parallel>, #tpu.dimension_semantics<arbitrary>], iteration_bounds = array<i64: 2, 1>, scalar_prefetch = 0 : i64, scratch_operands = 2 : i64, tpu.core_type = #tpu.core_type<tc>, window_params = [{transform_indices = @transform_0, window_bounds = array<i64: 1, 8, 32>}, {pipeline_mode = #tpu.pipeline_mode<synchronous>, transform_indices = @transform_1, window_bounds = array<i64: 4, 32, 8>}, {pipeline_mode = #tpu.pipeline_mode<synchronous>, transform_indices = @transform_2, window_bounds = array<i64: 4, 32, 8>}, {pipeline_mode = #tpu.pipeline_mode<synchronous>, transform_indices = @transform_3, window_bounds = array<i64: 4, 32, 8>}, {pipeline_mode = #tpu.pipeline_mode<synchronous>, transform_indices = @transform_4, window_bounds = array<i64: 4, 8, 32>}, {pipeline_mode = #tpu.pipeline_mode<synchronous>, transform_indices = @transform_5, window_bounds = array<i64: 1, 32>}, {pipeline_mode = #tpu.pipeline_mode<synchronous>, transform_indices = @transform_6, window_bounds = array<i64: 1, 32>}, {pipeline_mode = #tpu.pipeline_mode<synchronous>, transform_indices = @transform_7, window_bounds = array<i64: 1, 32>}, {pipeline_mode = #tpu.pipeline_mode<synchronous>, transform_indices = @transform_8, window_bounds = array<i64: 32, 64>}, {pipeline_mode = #tpu.pipeline_mode<synchronous>, transform_indices = @transform_9, window_bounds = array<i64: 1, 64>}, {pipeline_mode = #tpu.pipeline_mode<synchronous>, transform_indices = @transform_10, window_bounds = array<i64: 64, 32>}, {pipeline_mode = #tpu.pipeline_mode<synchronous>, transform_indices = @transform_11, window_bounds = array<i64: 1, 32>}, {pipeline_mode = #tpu.pipeline_mode<synchronous>, transform_indices = @transform_12, window_bounds = array<i64: 1, 32>}, {pipeline_mode = #tpu.pipeline_mode<synchronous>, transform_indices = @transform_13, window_bounds = array<i64: 1, 32>}, {transform_indices = @transform_14, window_bounds = array<i64: 1, 8, 32>}]} {
    %c0_i32 = arith.constant 0 : i32
    %0 = arith.cmpi eq, %arg1, %c0_i32 : i32
    %1 = arith.extui %0 : i1 to i32
    %c0_i32_0 = arith.constant 0 : i32
    %2 = arith.cmpi ne, %1, %c0_i32_0 : i32
    scf.if %2 {
      %c0_54 = arith.constant 0 : index
      %c0_55 = arith.constant 0 : index
      %c0_56 = arith.constant 0 : index
      %103 = vector.load %arg2[%c0_54, %c0_55, %c0_56] : memref<1x8x32xf32, #tpu.memory_space<vmem>>, vector<1x8x32xf32>
      %104 = vector.shape_cast %103 : vector<1x8x32xf32> to vector<8x32xf32>
      %105 = arith.truncf %104 : vector<8x32xf32> to vector<8x32xbf16>
      %106 = vector.shape_cast %105 : vector<8x32xbf16> to vector<1x8x32xbf16>
      %107 = vector.broadcast %106 : vector<1x8x32xbf16> to vector<4x8x32xbf16>
      %c0_57 = arith.constant 0 : index
      %c0_58 = arith.constant 0 : index
      %c0_59 = arith.constant 0 : index
      %108 = vector.load %arg4[%c0_57, %c0_58, %c0_59] : memref<4x32x8xbf16, #tpu.memory_space<vmem>>, vector<4x32x8xbf16>
      "tpu.trace_start"() <{level = 10 : i32, message = "hsd,hdk->hsk"}> : () -> ()
      %cst_60 = arith.constant dense<0.000000e+00> : vector<4x8x8xf32>
      %109 = tpu.matmul %107, %108, %cst_60 {dimension_numbers = #tpu.dot_dimension_numbers<[2], [1], [1], [2], [0, 0, 0, 1, 1, 2], [0], [0]>} : vector<4x8x32xbf16>, vector<4x32x8xbf16>, vector<4x8x8xf32> -> vector<4x8x8xf32>
      "tpu.trace_stop"() : () -> ()
      %110 = arith.truncf %109 : vector<4x8x8xf32> to vector<4x8x8xbf16>
      %c0_61 = arith.constant 0 : index
      %c0_62 = arith.constant 0 : index
      %c0_63 = arith.constant 0 : index
      %111 = vector.load %arg17[%c0_61, %c0_62, %c0_63] : memref<4x8x8xbf16, #tpu.memory_space<vmem>>, vector<4x8x8xbf16>
      tpu.vector_store %arg17[%c0_61, %c0_62, %c0_63], %110 {strides = array<i32>} : memref<4x8x8xbf16, #tpu.memory_space<vmem>>, vector<4x8x8xbf16>,
      %c0_64 = arith.constant 0 : index
      %c0_65 = arith.constant 0 : index
      %c0_66 = arith.constant 0 : index
      %112 = vector.load %arg5[%c0_64, %c0_65, %c0_66] : memref<4x32x8xbf16, #tpu.memory_space<vmem>>, vector<4x32x8xbf16>
      "tpu.trace_start"() <{level = 10 : i32, message = "hsd,hdk->hsk"}> : () -> ()
      %cst_67 = arith.constant dense<0.000000e+00> : vector<4x8x8xf32>
      %113 = tpu.matmul %107, %112, %cst_67 {dimension_numbers = #tpu.dot_dimension_numbers<[2], [1], [1], [2], [0, 0, 0, 1, 1, 2], [0], [0]>} : vector<4x8x32xbf16>, vector<4x32x8xbf16>, vector<4x8x8xf32> -> vector<4x8x8xf32>
      "tpu.trace_stop"() : () -> ()
      %114 = arith.truncf %113 : vector<4x8x8xf32> to vector<4x8x8xbf16>
      %c0_68 = arith.constant 0 : index
      %c0_69 = arith.constant 0 : index
      %c0_70 = arith.constant 0 : index
      %115 = vector.load %arg18[%c0_68, %c0_69, %c0_70] : memref<4x8x8xbf16, #tpu.memory_space<vmem>>, vector<4x8x8xbf16>
      tpu.vector_store %arg18[%c0_68, %c0_69, %c0_70], %114 {strides = array<i32>} : memref<4x8x8xbf16, #tpu.memory_space<vmem>>, vector<4x8x8xbf16>,
    } else {
    }
    %c8_i32 = arith.constant 8 : i32
    %3 = arith.muli %arg1, %c8_i32 : i32
    %4 = tpu.assume_multiple %3, 8 : i32
    %c0 = arith.constant 0 : index
    %5 = arith.index_cast %4 : i32 to index
    %c0_1 = arith.constant 0 : index
    %6 = vector.load %arg2[%c0, %5, %c0_1] : memref<1x8x32xf32, #tpu.memory_space<vmem>>, vector<1x8x32xf32>
    %7 = vector.shape_cast %6 : vector<1x8x32xf32> to vector<8x32xf32>
    %8 = arith.truncf %7 : vector<8x32xf32> to vector<8x32xbf16>
    %9 = vector.shape_cast %8 : vector<8x32xbf16> to vector<1x8x32xbf16>
    %10 = vector.broadcast %9 : vector<1x8x32xbf16> to vector<4x8x32xbf16>
    %c0_2 = arith.constant 0 : index
    %c0_3 = arith.constant 0 : index
    %c0_4 = arith.constant 0 : index
    %11 = vector.load %arg3[%c0_2, %c0_3, %c0_4] : memref<4x32x8xbf16, #tpu.memory_space<vmem>>, vector<4x32x8xbf16>
    "tpu.trace_start"() <{level = 10 : i32, message = "hsd,hdk->hsk"}> : () -> ()
    %cst = arith.constant dense<0.000000e+00> : vector<4x8x8xf32>
    %12 = tpu.matmul %10, %11, %cst {dimension_numbers = #tpu.dot_dimension_numbers<[2], [1], [1], [2], [0, 0, 0, 1, 1, 2], [0], [0]>} : vector<4x8x32xbf16>, vector<4x32x8xbf16>, vector<4x8x8xf32> -> vector<4x8x8xf32>
    "tpu.trace_stop"() : () -> ()
    %13 = arith.truncf %12 : vector<4x8x8xf32> to vector<4x8x8xbf16>
    %c0_5 = arith.constant 0 : index
    %c0_6 = arith.constant 0 : index
    %c0_7 = arith.constant 0 : index
    %14 = vector.load %arg17[%c0_5, %c0_6, %c0_7] : memref<4x8x8xbf16, #tpu.memory_space<vmem>>, vector<4x8x8xbf16>
    "tpu.trace_start"() <{level = 10 : i32, message = "hqd,hkd->hqk"}> : () -> ()
    %cst_8 = arith.constant dense<0.000000e+00> : vector<4x8x8xf32>
    %15 = tpu.matmul %13, %14, %cst_8 {dimension_numbers = #tpu.dot_dimension_numbers<[2], [2], [1], [1], [0, 0, 0, 1, 1, 1], [0], [0]>} : vector<4x8x8xbf16>, vector<4x8x8xbf16>, vector<4x8x8xf32> -> vector<4x8x8xf32>
    "tpu.trace_stop"() : () -> ()
    %cst_9 = arith.constant dense<0xFF800000> : vector<4x8xf32>
    %16 = vector.multi_reduction <maximumf>, %15, %cst_9 [2] : vector<4x8x8xf32> to vector<4x8xf32>
    %17 = vector.shape_cast %16 : vector<4x8xf32> to vector<4x8x1xf32>
    %18 = vector.broadcast %17 : vector<4x8x1xf32> to vector<4x8x8xf32>
    %19 = arith.subf %15, %18 : vector<4x8x8xf32>
    %20 = math.exp %19 : vector<4x8x8xf32>
    %cst_10 = arith.constant dense<0.000000e+00> : vector<4x8xf32>
    %21 = vector.multi_reduction <add>, %20, %cst_10 [2] : vector<4x8x8xf32> to vector<4x8xf32>
    %22 = vector.shape_cast %21 : vector<4x8xf32> to vector<4x8x1xf32>
    %23 = tpu.reciprocal %22 {approx = true} : vector<4x8x1xf32> -> vector<4x8x1xf32>
    %24 = vector.broadcast %23 : vector<4x8x1xf32> to vector<4x8x8xf32>
    %25 = arith.mulf %20, %24 : vector<4x8x8xf32>
    %26 = arith.truncf %25 : vector<4x8x8xf32> to vector<4x8x8xbf16>
    %c0_11 = arith.constant 0 : index
    %c0_12 = arith.constant 0 : index
    %c0_13 = arith.constant 0 : index
    %27 = vector.load %arg18[%c0_11, %c0_12, %c0_13] : memref<4x8x8xbf16, #tpu.memory_space<vmem>>, vector<4x8x8xbf16>
    "tpu.trace_start"() <{level = 10 : i32, message = "hqk,hkd->hqd"}> : () -> ()
    %cst_14 = arith.constant dense<0.000000e+00> : vector<4x8x8xf32>
    %28 = tpu.matmul %26, %27, %cst_14 {dimension_numbers = #tpu.dot_dimension_numbers<[2], [1], [1], [2], [0, 0, 0, 1, 1, 2], [0], [0]>} : vector<4x8x8xbf16>, vector<4x8x8xbf16>, vector<4x8x8xf32> -> vector<4x8x8xf32>
    "tpu.trace_stop"() : () -> ()
    %29 = arith.truncf %28 : vector<4x8x8xf32> to vector<4x8x8xbf16>
    %c0_15 = arith.constant 0 : index
    %c0_16 = arith.constant 0 : index
    %c0_17 = arith.constant 0 : index
    %30 = vector.load %arg6[%c0_15, %c0_16, %c0_17] : memref<4x8x32xbf16, #tpu.memory_space<vmem>>, vector<4x8x32xbf16>
    "tpu.trace_start"() <{level = 10 : i32, message = "hqd,hdn->hqn"}> : () -> ()
    %cst_18 = arith.constant dense<0.000000e+00> : vector<4x8x32xf32>
    %31 = tpu.matmul %29, %30, %cst_18 {dimension_numbers = #tpu.dot_dimension_numbers<[2], [1], [1], [2], [0, 0, 0, 1, 1, 2], [0], [0]>} : vector<4x8x8xbf16>, vector<4x8x32xbf16>, vector<4x8x32xf32> -> vector<4x8x32xf32>
    "tpu.trace_stop"() : () -> ()
    %cst_19 = arith.constant dense<0.000000e+00> : vector<8x32xf32>
    %32 = vector.multi_reduction <add>, %31, %cst_19 [0] : vector<4x8x32xf32> to vector<8x32xf32>
    %c0_20 = arith.constant 0 : index
    %c0_21 = arith.constant 0 : index
    %33 = vector.load %arg7[%c0_20, %c0_21] : memref<1x32xf32, #tpu.memory_space<vmem>>, vector<1x32xf32>
    %34 = vector.broadcast %33 : vector<1x32xf32> to vector<8x32xf32>
    %35 = arith.addf %32, %34 : vector<8x32xf32>
    %36 = arith.addf %7, %35 : vector<8x32xf32>
    %c0_22 = arith.constant 0 : index
    %c0_23 = arith.constant 0 : index
    %37 = vector.load %arg8[%c0_22, %c0_23] : memref<1x32xf32, #tpu.memory_space<vmem>>, vector<1x32xf32>
    %c0_24 = arith.constant 0 : index
    %c0_25 = arith.constant 0 : index
    %38 = vector.load %arg9[%c0_24, %c0_25] : memref<1x32xf32, #tpu.memory_space<vmem>>, vector<1x32xf32>
    %cst_26 = arith.constant dense<0.000000e+00> : vector<8xf32>
    %39 = vector.multi_reduction <add>, %36, %cst_26 [1] : vector<8x32xf32> to vector<8xf32>
    %40 = vector.shape_cast %39 : vector<8xf32> to vector<8x1xf32>
    %cst_27 = arith.constant 3.125000e-02 : f32
    %41 = vector.broadcast %cst_27 : f32 to vector<8x1xf32>
    %42 = arith.mulf %40, %41 : vector<8x1xf32>
    %43 = arith.mulf %36, %36 : vector<8x32xf32>
    %cst_28 = arith.constant dense<0.000000e+00> : vector<8xf32>
    %44 = vector.multi_reduction <add>, %43, %cst_28 [1] : vector<8x32xf32> to vector<8xf32>
    %45 = vector.shape_cast %44 : vector<8xf32> to vector<8x1xf32>
    %cst_29 = arith.constant 3.125000e-02 : f32
    %46 = vector.broadcast %cst_29 : f32 to vector<8x1xf32>
    %47 = arith.mulf %45, %46 : vector<8x1xf32>
    %48 = arith.mulf %42, %42 : vector<8x1xf32>
    %49 = arith.subf %47, %48 : vector<8x1xf32>
    %cst_30 = arith.constant 9.99999974E-6 : f32
    %50 = vector.broadcast %cst_30 : f32 to vector<8x1xf32>
    %51 = arith.addf %49, %50 : vector<8x1xf32>
    %52 = math.rsqrt %51 : vector<8x1xf32>
    %53 = vector.broadcast %42 : vector<8x1xf32> to vector<8x32xf32>
    %54 = arith.subf %36, %53 : vector<8x32xf32>
    %55 = vector.broadcast %52 : vector<8x1xf32> to vector<8x32xf32>
    %56 = arith.mulf %54, %55 : vector<8x32xf32>
    %57 = vector.broadcast %37 : vector<1x32xf32> to vector<8x32xf32>
    %58 = arith.mulf %56, %57 : vector<8x32xf32>
    %59 = vector.broadcast %38 : vector<1x32xf32> to vector<8x32xf32>
    %60 = arith.addf %58, %59 : vector<8x32xf32>
    %61 = arith.truncf %60 : vector<8x32xf32> to vector<8x32xbf16>
    %c0_31 = arith.constant 0 : index
    %c0_32 = arith.constant 0 : index
    %62 = vector.load %arg10[%c0_31, %c0_32] : memref<32x64xbf16, #tpu.memory_space<vmem>>, vector<32x64xbf16>
    %cst_33 = arith.constant dense<0.000000e+00> : vector<8x64xf32>
    %63 = tpu.matmul %61, %62, %cst_33 {dimension_numbers = #tpu.dot_dimension_numbers<[1], [0], [0], [1], [0, 0, 1, 1], [], []>} : vector<8x32xbf16>, vector<32x64xbf16>, vector<8x64xf32> -> vector<8x64xf32>
    %c0_34 = arith.constant 0 : index
    %c0_35 = arith.constant 0 : index
    %64 = vector.load %arg11[%c0_34, %c0_35] : memref<1x64xf32, #tpu.memory_space<vmem>>, vector<1x64xf32>
    %65 = vector.broadcast %64 : vector<1x64xf32> to vector<8x64xf32>
    %66 = arith.addf %63, %65 : vector<8x64xf32>
    %cst_36 = arith.constant 0.000000e+00 : f32
    %67 = vector.broadcast %cst_36 : f32 to vector<8x64xf32>
    %68 = arith.maximumf %66, %67 : vector<8x64xf32>
    %69 = arith.truncf %68 : vector<8x64xf32> to vector<8x64xbf16>
    %c0_37 = arith.constant 0 : index
    %c0_38 = arith.constant 0 : index
    %70 = vector.load %arg12[%c0_37, %c0_38] : memref<64x32xbf16, #tpu.memory_space<vmem>>, vector<64x32xbf16>
    %cst_39 = arith.constant dense<0.000000e+00> : vector<8x32xf32>
    %71 = tpu.matmul %69, %70, %cst_39 {dimension_numbers = #tpu.dot_dimension_numbers<[1], [0], [0], [1], [0, 0, 1, 1], [], []>} : vector<8x64xbf16>, vector<64x32xbf16>, vector<8x32xf32> -> vector<8x32xf32>
    %c0_40 = arith.constant 0 : index
    %c0_41 = arith.constant 0 : index
    %72 = vector.load %arg13[%c0_40, %c0_41] : memref<1x32xf32, #tpu.memory_space<vmem>>, vector<1x32xf32>
    %73 = vector.broadcast %72 : vector<1x32xf32> to vector<8x32xf32>
    %74 = arith.addf %71, %73 : vector<8x32xf32>
    %75 = arith.addf %60, %74 : vector<8x32xf32>
    %c0_42 = arith.constant 0 : index
    %c0_43 = arith.constant 0 : index
    %76 = vector.load %arg14[%c0_42, %c0_43] : memref<1x32xf32, #tpu.memory_space<vmem>>, vector<1x32xf32>
    %c0_44 = arith.constant 0 : index
    %c0_45 = arith.constant 0 : index
    %77 = vector.load %arg15[%c0_44, %c0_45] : memref<1x32xf32, #tpu.memory_space<vmem>>, vector<1x32xf32>
    %cst_46 = arith.constant dense<0.000000e+00> : vector<8xf32>
    %78 = vector.multi_reduction <add>, %75, %cst_46 [1] : vector<8x32xf32> to vector<8xf32>
    %79 = vector.shape_cast %78 : vector<8xf32> to vector<8x1xf32>
    %cst_47 = arith.constant 3.125000e-02 : f32
    %80 = vector.broadcast %cst_47 : f32 to vector<8x1xf32>
    %81 = arith.mulf %79, %80 : vector<8x1xf32>
    %82 = arith.mulf %75, %75 : vector<8x32xf32>
    %cst_48 = arith.constant dense<0.000000e+00> : vector<8xf32>
    %83 = vector.multi_reduction <add>, %82, %cst_48 [1] : vector<8x32xf32> to vector<8xf32>
    %84 = vector.shape_cast %83 : vector<8xf32> to vector<8x1xf32>
    %cst_49 = arith.constant 3.125000e-02 : f32
    %85 = vector.broadcast %cst_49 : f32 to vector<8x1xf32>
    %86 = arith.mulf %84, %85 : vector<8x1xf32>
    %87 = arith.mulf %81, %81 : vector<8x1xf32>
    %88 = arith.subf %86, %87 : vector<8x1xf32>
    %cst_50 = arith.constant 9.99999974E-6 : f32
    %89 = vector.broadcast %cst_50 : f32 to vector<8x1xf32>
    %90 = arith.addf %88, %89 : vector<8x1xf32>
    %91 = math.rsqrt %90 : vector<8x1xf32>
    %92 = vector.broadcast %81 : vector<8x1xf32> to vector<8x32xf32>
    %93 = arith.subf %75, %92 : vector<8x32xf32>
    %94 = vector.broadcast %91 : vector<8x1xf32> to vector<8x32xf32>
    %95 = arith.mulf %93, %94 : vector<8x32xf32>
    %96 = vector.broadcast %76 : vector<1x32xf32> to vector<8x32xf32>
    %97 = arith.mulf %95, %96 : vector<8x32xf32>
    %98 = vector.broadcast %77 : vector<1x32xf32> to vector<8x32xf32>
    %99 = arith.addf %97, %98 : vector<8x32xf32>
    %c0_51 = arith.constant 0 : index
    %c0_52 = arith.constant 0 : index
    %c0_53 = arith.constant 0 : index
    %100 = vector.load %arg16[%c0_51, %c0_52, %c0_53] : memref<1x8x32xf32, #tpu.memory_space<vmem>>, vector<1x8x32xf32>
    %101 = vector.shape_cast %100 : vector<1x8x32xf32> to vector<8x32xf32>
    %102 = vector.shape_cast %99 : vector<8x32xf32> to vector<1x8x32xf32>
    tpu.vector_store %arg16[%c0_51, %c0_52, %c0_53], %102 {strides = array<i32>} : memref<1x8x32xf32, #tpu.memory_space<vmem>>, vector<1x8x32xf32>,
    return
  }
  func.func @transform_0(%arg0: i32, %arg1: i32) -> (i32, i32, i32) {
    %c0_i32 = arith.constant 0 : i32
    %c0_i32_0 = arith.constant 0 : i32
    %c0_i32_1 = arith.constant 0 : i32
    return %arg0, %c0_i32, %c0_i32_0 : i32, i32, i32
  }
  func.func @transform_1(%arg0: i32, %arg1: i32) -> (i32, i32, i32) {
    %c0_i32 = arith.constant 0 : i32
    %c0_i32_0 = arith.constant 0 : i32
    %c0_i32_1 = arith.constant 0 : i32
    %c0_i32_2 = arith.constant 0 : i32
    return %c0_i32, %c0_i32_0, %c0_i32_1 : i32, i32, i32
  }
  func.func @transform_2(%arg0: i32, %arg1: i32) -> (i32, i32, i32) {
    %c0_i32 = arith.constant 0 : i32
    %c0_i32_0 = arith.constant 0 : i32
    %c0_i32_1 = arith.constant 0 : i32
    %c0_i32_2 = arith.constant 0 : i32
    return %c0_i32, %c0_i32_0, %c0_i32_1 : i32, i32, i32
  }
  func.func @transform_3(%arg0: i32, %arg1: i32) -> (i32, i32, i32) {
    %c0_i32 = arith.constant 0 : i32
    %c0_i32_0 = arith.constant 0 : i32
    %c0_i32_1 = arith.constant 0 : i32
    %c0_i32_2 = arith.constant 0 : i32
    return %c0_i32, %c0_i32_0, %c0_i32_1 : i32, i32, i32
  }
  func.func @transform_4(%arg0: i32, %arg1: i32) -> (i32, i32, i32) {
    %c0_i32 = arith.constant 0 : i32
    %c0_i32_0 = arith.constant 0 : i32
    %c0_i32_1 = arith.constant 0 : i32
    %c0_i32_2 = arith.constant 0 : i32
    return %c0_i32, %c0_i32_0, %c0_i32_1 : i32, i32, i32
  }
  func.func @transform_5(%arg0: i32, %arg1: i32) -> (i32, i32) {
    %c0_i32 = arith.constant 0 : i32
    %c0_i32_0 = arith.constant 0 : i32
    %c0_i32_1 = arith.constant 0 : i32
    return %c0_i32, %c0_i32_0 : i32, i32
  }
  func.func @transform_6(%arg0: i32, %arg1: i32) -> (i32, i32) {
    %c0_i32 = arith.constant 0 : i32
    %c0_i32_0 = arith.constant 0 : i32
    %c0_i32_1 = arith.constant 0 : i32
    return %c0_i32, %c0_i32_0 : i32, i32
  }
  func.func @transform_7(%arg0: i32, %arg1: i32) -> (i32, i32) {
    %c0_i32 = arith.constant 0 : i32
    %c0_i32_0 = arith.constant 0 : i32
    %c0_i32_1 = arith.constant 0 : i32
    return %c0_i32, %c0_i32_0 : i32, i32
  }
  func.func @transform_8(%arg0: i32, %arg1: i32) -> (i32, i32) {
    %c0_i32 = arith.constant 0 : i32
    %c0_i32_0 = arith.constant 0 : i32
    %c0_i32_1 = arith.constant 0 : i32
    return %c0_i32, %c0_i32_0 : i32, i32
  }
  func.func @transform_9(%arg0: i32, %arg1: i32) -> (i32, i32) {
    %c0_i32 = arith.constant 0 : i32
    %c0_i32_0 = arith.constant 0 : i32
    %c0_i32_1 = arith.constant 0 : i32
    return %c0_i32, %c0_i32_0 : i32, i32
  }
  func.func @transform_10(%arg0: i32, %arg1: i32) -> (i32, i32) {
    %c0_i32 = arith.constant 0 : i32
    %c0_i32_0 = arith.constant 0 : i32
    %c0_i32_1 = arith.constant 0 : i32
    return %c0_i32, %c0_i32_0 : i32, i32
  }
  func.func @transform_11(%arg0: i32, %arg1: i32) -> (i32, i32) {
    %c0_i32 = arith.constant 0 : i32
    %c0_i32_0 = arith.constant 0 : i32
    %c0_i32_1 = arith.constant 0 : i32
    return %c0_i32, %c0_i32_0 : i32, i32
  }
  func.func @transform_12(%arg0: i32, %arg1: i32) -> (i32, i32) {
    %c0_i32 = arith.constant 0 : i32
    %c0_i32_0 = arith.constant 0 : i32
    %c0_i32_1 = arith.constant 0 : i32
    return %c0_i32, %c0_i32_0 : i32, i32
  }
  func.func @transform_13(%arg0: i32, %arg1: i32) -> (i32, i32) {
    %c0_i32 = arith.constant 0 : i32
    %c0_i32_0 = arith.constant 0 : i32
    %c0_i32_1 = arith.constant 0 : i32
    return %c0_i32, %c0_i32_0 : i32, i32
  }
  func.func @transform_14(%arg0: i32, %arg1: i32) -> (i32, i32, i32) {
    %c0_i32 = arith.constant 0 : i32
    %c0_i32_0 = arith.constant 0 : i32
    return %arg0, %arg1, %c0_i32 : i32, i32, i32
  }
}

</mosaic_0001>

<llo_original>
// kernel: tpu_custom_call.1
$region0: #{tpu_custom_call.1}
  #allocation0 [shape = 'u32[]', space=smem, size = 0x4, offset = 0x4, fixed_abs, tag = 'smem constant byte address 0x4 - core index']
  #allocation1 [shape = 'u32[144,128]{1,0:T(1,128)}', space=vmem, size = 0x12000, scoped, tag = 'internal scratch']
  #allocation2 [shape = 'bf16[4,8,8]{2,1,0:T(8,128)(2,1)}', space=vmem, size = 0x2000, scoped, tag = 'scratch operand']
  #allocation3 [shape = 'bf16[4,8,8]{2,1,0:T(8,128)(2,1)}', space=vmem, size = 0x2000, scoped, tag = 'scratch operand']
  %s0 = inlined_call_operand.vmem [shape: f32[2,8,32], index: 0, kind: input, shape index: {}]
  %s1 = inlined_call_operand.vmem [shape: bf16[4,32,8], index: 1, kind: input, shape index: {}]
  %s2 = inlined_call_operand.vmem [shape: bf16[4,32,8], index: 2, kind: input, shape index: {}]
  %s3 = inlined_call_operand.vmem [shape: bf16[4,32,8], index: 3, kind: input, shape index: {}]
  %s4 = inlined_call_operand.vmem [shape: bf16[4,8,32], index: 4, kind: input, shape index: {}]
  %s5 = inlined_call_operand.vmem [shape: f32[1,32], index: 5, kind: input, shape index: {}]
  %s6 = inlined_call_operand.vmem [shape: f32[1,32], index: 6, kind: input, shape index: {}]
  %s7 = inlined_call_operand.vmem [shape: f32[1,32], index: 7, kind: input, shape index: {}]
  %s8 = inlined_call_operand.vmem [shape: bf16[32,64], index: 8, kind: input, shape index: {}]
  %s9 = inlined_call_operand.vmem [shape: f32[1,64], index: 9, kind: input, shape index: {}]
  %s10 = inlined_call_operand.vmem [shape: bf16[64,32], index: 10, kind: input, shape index: {}]
  %s11 = inlined_call_operand.vmem [shape: f32[1,32], index: 11, kind: input, shape index: {}]
  %s12 = inlined_call_operand.vmem [shape: f32[1,32], index: 12, kind: input, shape index: {}]
  %s13 = inlined_call_operand.vmem [shape: f32[1,32], index: 13, kind: input, shape index: {}]
  %s14 = inlined_call_operand.hbm [shape: f32[2,8,32], index: 14, kind: output, shape index: {}]
  %s15 = sld [smem:[#allocation0]]
  $region93: #{tpu_custom_call.1} parent=0
    _
  %s17 = ssub.s32 1, %s15
  %s18 = scalar_select 0, %s17, %s15
  $region1: #{tpu_custom_call.1} parent=0
    #allocation4 [shape = 'u8[8192]{0}', space=vmem, size = 0x2000, scoped, tag = 'output window, operand 0']
    #allocation5 [shape = 's32[2]{0}', space=sflag, size = 0x8, scoped, tag = 'scoped memory for tpu_custom_call.1']
    %19 = vsyncpa [#allocation5], 0
    %s20 = scalar_lea.sflag [#allocation5], 1
    %21 = vsyncpa %s20, 0
    loop: start=0, step=1, limit=4
    $region2: #{tpu_custom_call.1} parent=1 // loop_pre_header
      _
    $region3: #{tpu_custom_call.1} parent=1 // loop_header
      %s23 = sphi 0, %s27
      %p24 = scmp.ge.s32.totalorder %s23, 4
      %s30 = sphi 0, %s42
      %s31 = sphi 0, %s38
      %s32 = sphi 0, %s30
      %s33 = sphi 0, %s31
      %s34 = sphi 0, %s32
      %s35 = sphi 0, %s33
      %s45 = sphi 0, %s47
      %s48 = sphi 0, %s45
      %s49 = sphi 0, %s48
      %s65 = sphi 0, %s49
      %s69 = sphi 0, %s69
      %s71 = sphi 0, %s69
      %s72 = sphi 0, %s71
      %s86 = sphi 0, %s72
      %s90 = sphi 0, %s90
      %s92 = sphi 0, %s90
      %s93 = sphi 0, %s92
      %s107 = sphi 0, %s93
      %s111 = sphi 0, %s111
      %s113 = sphi 0, %s111
      %s114 = sphi 0, %s113
      %s128 = sphi 0, %s114
      %s132 = sphi 0, %s132
      %s134 = sphi 0, %s132
      %s135 = sphi 0, %s134
      %s149 = sphi 0, %s135
      %s153 = sphi 0, %s153
      %s155 = sphi 0, %s153
      %s156 = sphi 0, %s155
      %s170 = sphi 0, %s156
      %s174 = sphi 0, %s174
      %s176 = sphi 0, %s174
      %s177 = sphi 0, %s176
      %s191 = sphi 0, %s177
      %s195 = sphi 0, %s195
      %s197 = sphi 0, %s195
      %s198 = sphi 0, %s197
      %s212 = sphi 0, %s198
      %s216 = sphi 0, %s216
      %s218 = sphi 0, %s216
      %s219 = sphi 0, %s218
      %s233 = sphi 0, %s219
      %s237 = sphi 0, %s237
      %s239 = sphi 0, %s237
      %s240 = sphi 0, %s239
      %s254 = sphi 0, %s240
      %s258 = sphi 0, %s258
      %s260 = sphi 0, %s258
      %s261 = sphi 0, %s260
      %s275 = sphi 0, %s261
      %s279 = sphi 0, %s279
      %s281 = sphi 0, %s279
      %s282 = sphi 0, %s281
      %s296 = sphi 0, %s282
      %s300 = sphi 0, %s300
      %s302 = sphi 0, %s300
      %s303 = sphi 0, %s302
      %s317 = sphi 0, %s303
      %s321 = sphi 0, %s321
      %s323 = sphi 0, %s321
      %s324 = sphi 0, %s323
      %s338 = sphi 0, %s324
      %s346 = sphi 0, %s348
      %s349 = sphi 0, %s346
      %s350 = sphi 0, %s349
      %s366 = sphi 0, %s350
    $region4: #{tpu_custom_call.1} parent=1 // loop_header_branch
      %26 = sbr.rel (%p24) target = $region8
    $region5: #{tpu_custom_call.1} parent=1 // loop_body
      %s28 = ssub.s32 %s23, 1
      %s29 = ssub.s32 %s23, 2
      %s36 = sadd.s32 1, %s31
      %p37 = scmp.ge.s32.totalorder %s36, 1
      %s38 = scalar_select %p37, 0, %s36
      %s39 = sadd.s32 1, %s30
      %s40 = scalar_select %p37, %s39, %s30
      %p41 = scmp.ge.s32.totalorder %s40, 2
      %s42 = scalar_select %p41, 0, %s40
      %s43 = ssub.s32 %s30, %s42
      %p44 = scmp.eq.s32.totalorder %s43, 0
      %s46 = sadd.s32 %s45, 1
      %s47 = scalar_select %p44, %s45, %s46
      %p50 = pneg %p44
      %p51 = scmp.eq.s32.totalorder %s23, 1
      %p52 = por %p50, %p51
      %p53 = scmp.ne.s32.totalorder %s45, %s48
      %p54 = scmp.eq.s32.totalorder %s23, 0
      %p55 = por %p53, %p54
      %p56 = scmp.ne.s32.totalorder %s45, %s48
      %p57 = scmp.eq.s32.totalorder %s28, 1
      %p58 = por %p56, %p57
      %p59 = scmp.ne.s32.totalorder %s48, %s49
      %p60 = scmp.eq.s32.totalorder %s28, 0
      %p61 = por %p59, %p60
      %p62 = scmp.ne.s32.totalorder %s48, %s49
      %p63 = scmp.eq.s32.totalorder %s29, 1
      %p64 = por %p62, %p63
      %p66 = scmp.ne.s32.totalorder %s49, %s65
      %p67 = scmp.eq.s32.totalorder %s29, 0
      %p68 = por %p66, %p67
      %s70 = sadd.s32 %s69, 1
      %p73 = scmp.eq.s32.totalorder %s23, 1
      %p74 = scmp.ne.s32.totalorder %s69, %s71
      %p75 = scmp.eq.s32.totalorder %s23, 0
      %p76 = por %p74, %p75
      %p77 = scmp.ne.s32.totalorder %s69, %s71
      %p78 = scmp.eq.s32.totalorder %s28, 1
      %p79 = por %p77, %p78
      %p80 = scmp.ne.s32.totalorder %s71, %s72
      %p81 = scmp.eq.s32.totalorder %s28, 0
      %p82 = por %p80, %p81
      %p83 = scmp.ne.s32.totalorder %s71, %s72
      %p84 = scmp.eq.s32.totalorder %s29, 1
      %p85 = por %p83, %p84
      %p87 = scmp.ne.s32.totalorder %s72, %s86
      %p88 = scmp.eq.s32.totalorder %s29, 0
      %p89 = por %p87, %p88
      %s91 = sadd.s32 %s90, 1
      %p94 = scmp.eq.s32.totalorder %s23, 1
      %p95 = scmp.ne.s32.totalorder %s90, %s92
      %p96 = scmp.eq.s32.totalorder %s23, 0
      %p97 = por %p95, %p96
      %p98 = scmp.ne.s32.totalorder %s90, %s92
      %p99 = scmp.eq.s32.totalorder %s28, 1
      %p100 = por %p98, %p99
      %p101 = scmp.ne.s32.totalorder %s92, %s93
      %p102 = scmp.eq.s32.totalorder %s28, 0
      %p103 = por %p101, %p102
      %p104 = scmp.ne.s32.totalorder %s92, %s93
      %p105 = scmp.eq.s32.totalorder %s29, 1
      %p106 = por %p104, %p105
      %p108 = scmp.ne.s32.totalorder %s93, %s107
      %p109 = scmp.eq.s32.totalorder %s29, 0
      %p110 = por %p108, %p109
      %s112 = sadd.s32 %s111, 1
      %p115 = scmp.eq.s32.totalorder %s23, 1
      %p116 = scmp.ne.s32.totalorder %s111, %s113
      %p117 = scmp.eq.s32.totalorder %s23, 0
      %p118 = por %p116, %p117
      %p119 = scmp.ne.s32.totalorder %s111, %s113
      %p120 = scmp.eq.s32.totalorder %s28, 1
      %p121 = por %p119, %p120
      %p122 = scmp.ne.s32.totalorder %s113, %s114
      %p123 = scmp.eq.s32.totalorder %s28, 0
      %p124 = por %p122, %p123
      %p125 = scmp.ne.s32.totalorder %s113, %s114
      %p126 = scmp.eq.s32.totalorder %s29, 1
      %p127 = por %p125, %p126
      %p129 = scmp.ne.s32.totalorder %s114, %s128
      %p130 = scmp.eq.s32.totalorder %s29, 0
      %p131 = por %p129, %p130
      %s133 = sadd.s32 %s132, 1
      %p136 = scmp.eq.s32.totalorder %s23, 1
      %p137 = scmp.ne.s32.totalorder %s132, %s134
      %p138 = scmp.eq.s32.totalorder %s23, 0
      %p139 = por %p137, %p138
      %p140 = scmp.ne.s32.totalorder %s132, %s134
      %p141 = scmp.eq.s32.totalorder %s28, 1
      %p142 = por %p140, %p141
      %p143 = scmp.ne.s32.totalorder %s134, %s135
      %p144 = scmp.eq.s32.totalorder %s28, 0
      %p145 = por %p143, %p144
      %p146 = scmp.ne.s32.totalorder %s134, %s135
      %p147 = scmp.eq.s32.totalorder %s29, 1
      %p148 = por %p146, %p147
      %p150 = scmp.ne.s32.totalorder %s135, %s149
      %p151 = scmp.eq.s32.totalorder %s29, 0
      %p152 = por %p150, %p151
      %s154 = sadd.s32 %s153, 1
      %p157 = scmp.eq.s32.totalorder %s23, 1
      %p158 = scmp.ne.s32.totalorder %s153, %s155
      %p159 = scmp.eq.s32.totalorder %s23, 0
      %p160 = por %p158, %p159
      %p161 = scmp.ne.s32.totalorder %s153, %s155
      %p162 = scmp.eq.s32.totalorder %s28, 1
      %p163 = por %p161, %p162
      %p164 = scmp.ne.s32.totalorder %s155, %s156
      %p165 = scmp.eq.s32.totalorder %s28, 0
      %p166 = por %p164, %p165
      %p167 = scmp.ne.s32.totalorder %s155, %s156
      %p168 = scmp.eq.s32.totalorder %s29, 1
      %p169 = por %p167, %p168
      %p171 = scmp.ne.s32.totalorder %s156, %s170
      %p172 = scmp.eq.s32.totalorder %s29, 0
      %p173 = por %p171, %p172
      %s175 = sadd.s32 %s174, 1
      %p178 = scmp.eq.s32.totalorder %s23, 1
      %p179 = scmp.ne.s32.totalorder %s174, %s176
      %p180 = scmp.eq.s32.totalorder %s23, 0
      %p181 = por %p179, %p180
      %p182 = scmp.ne.s32.totalorder %s174, %s176
      %p183 = scmp.eq.s32.totalorder %s28, 1
      %p184 = por %p182, %p183
      %p185 = scmp.ne.s32.totalorder %s176, %s177
      %p186 = scmp.eq.s32.totalorder %s28, 0
      %p187 = por %p185, %p186
      %p188 = scmp.ne.s32.totalorder %s176, %s177
      %p189 = scmp.eq.s32.totalorder %s29, 1
      %p190 = por %p188, %p189
      %p192 = scmp.ne.s32.totalorder %s177, %s191
      %p193 = scmp.eq.s32.totalorder %s29, 0
      %p194 = por %p192, %p193
      %s196 = sadd.s32 %s195, 1
      %p199 = scmp.eq.s32.totalorder %s23, 1
      %p200 = scmp.ne.s32.totalorder %s195, %s197
      %p201 = scmp.eq.s32.totalorder %s23, 0
      %p202 = por %p200, %p201
      %p203 = scmp.ne.s32.totalorder %s195, %s197
      %p204 = scmp.eq.s32.totalorder %s28, 1
      %p205 = por %p203, %p204
      %p206 = scmp.ne.s32.totalorder %s197, %s198
      %p207 = scmp.eq.s32.totalorder %s28, 0
      %p208 = por %p206, %p207
      %p209 = scmp.ne.s32.totalorder %s197, %s198
      %p210 = scmp.eq.s32.totalorder %s29, 1
      %p211 = por %p209, %p210
      %p213 = scmp.ne.s32.totalorder %s198, %s212
      %p214 = scmp.eq.s32.totalorder %s29, 0
      %p215 = por %p213, %p214
      %s217 = sadd.s32 %s216, 1
      %p220 = scmp.eq.s32.totalorder %s23, 1
      %p221 = scmp.ne.s32.totalorder %s216, %s218
      %p222 = scmp.eq.s32.totalorder %s23, 0
      %p223 = por %p221, %p222
      %p224 = scmp.ne.s32.totalorder %s216, %s218
      %p225 = scmp.eq.s32.totalorder %s28, 1
      %p226 = por %p224, %p225
      %p227 = scmp.ne.s32.totalorder %s218, %s219
      %p228 = scmp.eq.s32.totalorder %s28, 0
      %p229 = por %p227, %p228
      %p230 = scmp.ne.s32.totalorder %s218, %s219
      %p231 = scmp.eq.s32.totalorder %s29, 1
      %p232 = por %p230, %p231
      %p234 = scmp.ne.s32.totalorder %s219, %s233
      %p235 = scmp.eq.s32.totalorder %s29, 0
      %p236 = por %p234, %p235
      %s238 = sadd.s32 %s237, 1
      %p241 = scmp.eq.s32.totalorder %s23, 1
      %p242 = scmp.ne.s32.totalorder %s237, %s239
      %p243 = scmp.eq.s32.totalorder %s23, 0
      %p244 = por %p242, %p243
      %p245 = scmp.ne.s32.totalorder %s237, %s239
      %p246 = scmp.eq.s32.totalorder %s28, 1
      %p247 = por %p245, %p246
      %p248 = scmp.ne.s32.totalorder %s239, %s240
      %p249 = scmp.eq.s32.totalorder %s28, 0
      %p250 = por %p248, %p249
      %p251 = scmp.ne.s32.totalorder %s239, %s240
      %p252 = scmp.eq.s32.totalorder %s29, 1
      %p253 = por %p251, %p252
      %p255 = scmp.ne.s32.totalorder %s240, %s254
      %p256 = scmp.eq.s32.totalorder %s29, 0
      %p257 = por %p255, %p256
      %s259 = sadd.s32 %s258, 1
      %p262 = scmp.eq.s32.totalorder %s23, 1
      %p263 = scmp.ne.s32.totalorder %s258, %s260
      %p264 = scmp.eq.s32.totalorder %s23, 0
      %p265 = por %p263, %p264
      %p266 = scmp.ne.s32.totalorder %s258, %s260
      %p267 = scmp.eq.s32.totalorder %s28, 1
      %p268 = por %p266, %p267
      %p269 = scmp.ne.s32.totalorder %s260, %s261
      %p270 = scmp.eq.s32.totalorder %s28, 0
      %p271 = por %p269, %p270
      %p272 = scmp.ne.s32.totalorder %s260, %s261
      %p273 = scmp.eq.s32.totalorder %s29, 1
      %p274 = por %p272, %p273
      %p276 = scmp.ne.s32.totalorder %s261, %s275
      %p277 = scmp.eq.s32.totalorder %s29, 0
      %p278 = por %p276, %p277
      %s280 = sadd.s32 %s279, 1
      %p283 = scmp.eq.s32.totalorder %s23, 1
      %p284 = scmp.ne.s32.totalorder %s279, %s281
      %p285 = scmp.eq.s32.totalorder %s23, 0
      %p286 = por %p284, %p285
      %p287 = scmp.ne.s32.totalorder %s279, %s281
      %p288 = scmp.eq.s32.totalorder %s28, 1
      %p289 = por %p287, %p288
      %p290 = scmp.ne.s32.totalorder %s281, %s282
      %p291 = scmp.eq.s32.totalorder %s28, 0
      %p292 = por %p290, %p291
      %p293 = scmp.ne.s32.totalorder %s281, %s282
      %p294 = scmp.eq.s32.totalorder %s29, 1
      %p295 = por %p293, %p294
      %p297 = scmp.ne.s32.totalorder %s282, %s296
      %p298 = scmp.eq.s32.totalorder %s29, 0
      %p299 = por %p297, %p298
      %s301 = sadd.s32 %s300, 1
      %p304 = scmp.eq.s32.totalorder %s23, 1
      %p305 = scmp.ne.s32.totalorder %s300, %s302
      %p306 = scmp.eq.s32.totalorder %s23, 0
      %p307 = por %p305, %p306
      %p308 = scmp.ne.s32.totalorder %s300, %s302
      %p309 = scmp.eq.s32.totalorder %s28, 1
      %p310 = por %p308, %p309
      %p311 = scmp.ne.s32.totalorder %s302, %s303
      %p312 = scmp.eq.s32.totalorder %s28, 0
      %p313 = por %p311, %p312
      %p314 = scmp.ne.s32.totalorder %s302, %s303
      %p315 = scmp.eq.s32.totalorder %s29, 1
      %p316 = por %p314, %p315
      %p318 = scmp.ne.s32.totalorder %s303, %s317
      %p319 = scmp.eq.s32.totalorder %s29, 0
      %p320 = por %p318, %p319
      %s322 = sadd.s32 %s321, 1
      %p325 = scmp.eq.s32.totalorder %s23, 1
      %p326 = scmp.ne.s32.totalorder %s321, %s323
      %p327 = scmp.eq.s32.totalorder %s23, 0
      %p328 = por %p326, %p327
      %p329 = scmp.ne.s32.totalorder %s321, %s323
      %p330 = scmp.eq.s32.totalorder %s28, 1
      %p331 = por %p329, %p330
      %p332 = scmp.ne.s32.totalorder %s323, %s324
      %p333 = scmp.eq.s32.totalorder %s28, 0
      %p334 = por %p332, %p333
      %p335 = scmp.ne.s32.totalorder %s323, %s324
      %p336 = scmp.eq.s32.totalorder %s29, 1
      %p337 = por %p335, %p336
      %p339 = scmp.ne.s32.totalorder %s324, %s338
      %p340 = scmp.eq.s32.totalorder %s29, 0
      %p341 = por %p339, %p340
      %s342 = ssub.s32 %s30, %s42
      %s343 = ssub.s32 %s31, %s38
      %s344 = sor.u32 %s342, %s343
      %p345 = scmp.eq.s32.totalorder %s344, 0
      %s347 = sadd.s32 %s346, 1
      %s348 = scalar_select %p345, %s346, %s347
      %p351 = pneg %p345
      %p352 = scmp.eq.s32.totalorder %s23, 1
      %p353 = por %p351, %p352
      %p354 = scmp.ne.s32.totalorder %s346, %s349
      %p355 = scmp.eq.s32.totalorder %s23, 0
      %p356 = por %p354, %p355
      %p357 = scmp.ne.s32.totalorder %s346, %s349
      %p358 = scmp.eq.s32.totalorder %s28, 1
      %p359 = por %p357, %p358
      %p360 = scmp.ne.s32.totalorder %s349, %s350
      %p361 = scmp.eq.s32.totalorder %s28, 0
      %p362 = por %p360, %p361
      %p363 = scmp.ne.s32.totalorder %s349, %s350
      %p364 = scmp.eq.s32.totalorder %s29, 1
      %p365 = por %p363, %p364
      %p367 = scmp.ne.s32.totalorder %s350, %s366
      %p368 = scmp.eq.s32.totalorder %s29, 0
      %p369 = por %p367, %p368
      %p370 = scmp.le.s32.totalorder 1, %s23
      %p371 = scmp.lt.s32.totalorder %s23, 3
      %p372 = pnand %p370, %p371
      %p373 = pneg %p372
      // Predicated region
      $region9: #{tpu_custom_call.1} parent=5 // pred_check
        _
      $region10: #{tpu_custom_call.1} parent=5 // pred_check_branch
        %375 = sbr.rel (%p372) target = $region12
      $region11: #{tpu_custom_call.1} parent=5 // pred_region
        %s376 = ssub.s32 %s23, 1
        // Predicated region
        $region13: #{tpu_custom_call.1} parent=11 // pred_check
          %p377 = pneg %p82
        $region14: #{tpu_custom_call.1} parent=11 // pred_check_branch
          %379 = sbr.rel (%p377) target = $region16
        $region15: #{tpu_custom_call.1} parent=11 // pred_region
          _
        $region16: #{tpu_custom_call.1} parent=11 // pred_fallthru
          _
        // Predicated region
        $region17: #{tpu_custom_call.1} parent=11 // pred_check
          %p380 = pneg %p103
        $region18: #{tpu_custom_call.1} parent=11 // pred_check_branch
          %382 = sbr.rel (%p380) target = $region20
        $region19: #{tpu_custom_call.1} parent=11 // pred_region
          _
        $region20: #{tpu_custom_call.1} parent=11 // pred_fallthru
          _
        // Predicated region
        $region21: #{tpu_custom_call.1} parent=11 // pred_check
          %p383 = pneg %p124
        $region22: #{tpu_custom_call.1} parent=11 // pred_check_branch
          %385 = sbr.rel (%p383) target = $region24
        $region23: #{tpu_custom_call.1} parent=11 // pred_region
          _
        $region24: #{tpu_custom_call.1} parent=11 // pred_fallthru
          _
        // Predicated region
        $region25: #{tpu_custom_call.1} parent=11 // pred_check
          %p386 = pneg %p145
        $region26: #{tpu_custom_call.1} parent=11 // pred_check_branch
          %388 = sbr.rel (%p386) target = $region28
        $region27: #{tpu_custom_call.1} parent=11 // pred_region
          _
        $region28: #{tpu_custom_call.1} parent=11 // pred_fallthru
          _
        // Predicated region
        $region29: #{tpu_custom_call.1} parent=11 // pred_check
          %p389 = pneg %p166
        $region30: #{tpu_custom_call.1} parent=11 // pred_check_branch
          %391 = sbr.rel (%p389) target = $region32
        $region31: #{tpu_custom_call.1} parent=11 // pred_region
          _
        $region32: #{tpu_custom_call.1} parent=11 // pred_fallthru
          _
        // Predicated region
        $region33: #{tpu_custom_call.1} parent=11 // pred_check
          %p392 = pneg %p187
        $region34: #{tpu_custom_call.1} parent=11 // pred_check_branch
          %394 = sbr.rel (%p392) target = $region36
        $region35: #{tpu_custom_call.1} parent=11 // pred_region
          _
        $region36: #{tpu_custom_call.1} parent=11 // pred_fallthru
          _
        // Predicated region
        $region37: #{tpu_custom_call.1} parent=11 // pred_check
          %p395 = pneg %p208
        $region38: #{tpu_custom_call.1} parent=11 // pred_check_branch
          %397 = sbr.rel (%p395) target = $region40
        $region39: #{tpu_custom_call.1} parent=11 // pred_region
          _
        $region40: #{tpu_custom_call.1} parent=11 // pred_fallthru
          _
        // Predicated region
        $region41: #{tpu_custom_call.1} parent=11 // pred_check
          %p398 = pneg %p229
        $region42: #{tpu_custom_call.1} parent=11 // pred_check_branch
          %400 = sbr.rel (%p398) target = $region44
        $region43: #{tpu_custom_call.1} parent=11 // pred_region
          _
        $region44: #{tpu_custom_call.1} parent=11 // pred_fallthru
          _
        // Predicated region
        $region45: #{tpu_custom_call.1} parent=11 // pred_check
          %p401 = pneg %p250
        $region46: #{tpu_custom_call.1} parent=11 // pred_check_branch
          %403 = sbr.rel (%p401) target = $region48
        $region47: #{tpu_custom_call.1} parent=11 // pred_region
          _
        $region48: #{tpu_custom_call.1} parent=11 // pred_fallthru
          _
        // Predicated region
        $region49: #{tpu_custom_call.1} parent=11 // pred_check
          %p404 = pneg %p271
        $region50: #{tpu_custom_call.1} parent=11 // pred_check_branch
          %406 = sbr.rel (%p404) target = $region52
        $region51: #{tpu_custom_call.1} parent=11 // pred_region
          _
        $region52: #{tpu_custom_call.1} parent=11 // pred_fallthru
          _
        // Predicated region
        $region53: #{tpu_custom_call.1} parent=11 // pred_check
          %p407 = pneg %p292
        $region54: #{tpu_custom_call.1} parent=11 // pred_check_branch
          %409 = sbr.rel (%p407) target = $region56
        $region55: #{tpu_custom_call.1} parent=11 // pred_region
          _
        $region56: #{tpu_custom_call.1} parent=11 // pred_fallthru
          _
        // Predicated region
        $region57: #{tpu_custom_call.1} parent=11 // pred_check
          %p410 = pneg %p313
        $region58: #{tpu_custom_call.1} parent=11 // pred_check_branch
          %412 = sbr.rel (%p410) target = $region60
        $region59: #{tpu_custom_call.1} parent=11 // pred_region
          _
        $region60: #{tpu_custom_call.1} parent=11 // pred_fallthru
          _
        // Predicated region
        $region61: #{tpu_custom_call.1} parent=11 // pred_check
          %p413 = pneg %p334
        $region62: #{tpu_custom_call.1} parent=11 // pred_check_branch
          %415 = sbr.rel (%p413) target = $region64
        $region63: #{tpu_custom_call.1} parent=11 // pred_region
          _
        $region64: #{tpu_custom_call.1} parent=11 // pred_fallthru
          _
      $region12: #{tpu_custom_call.1} parent=5 // pred_fallthru
        _
      %p416 = scmp.lt.s32.totalorder %s23, 2
      // Predicated region
      $region65: #{tpu_custom_call.1} parent=5 // pred_check
        %p417 = pneg %p416
      $region66: #{tpu_custom_call.1} parent=5 // pred_check_branch
        %419 = sbr.rel (%p417) target = $region68
      $region67: #{tpu_custom_call.1} parent=5 // pred_region
        // Predicated region
        $region69: #{tpu_custom_call.1} parent=67 // pred_check
          %p420 = pneg %p55
        $region70: #{tpu_custom_call.1} parent=67 // pred_check_branch
          %422 = sbr.rel (%p420) target = $region72
        $region71: #{tpu_custom_call.1} parent=67 // pred_region
          %p423 = scmp.lt.s32.totalorder %s30, 1
          %s424 = scalar_select %p423, %s30, 1
          %s425 = smul.addr %s424, 8
          %s426 = scalar_lea.vmem %s0, %s425
        $region72: #{tpu_custom_call.1} parent=67 // pred_fallthru
          _
      $region68: #{tpu_custom_call.1} parent=5 // pred_fallthru
        _
      %p427 = scmp.le.s32.totalorder 1, %s23
      %p428 = scmp.lt.s32.totalorder %s23, 3
      %p429 = pnand %p427, %p428
      %p430 = pneg %p429
      // Predicated region
      $region73: #{tpu_custom_call.1} parent=5 // pred_check
        _
      $region74: #{tpu_custom_call.1} parent=5 // pred_check_branch
        %432 = sbr.rel (%p429) target = $region76
      $region75: #{tpu_custom_call.1} parent=5 // pred_region
        %s433 = ssub.s32 %s23, 1
        %p434 = scmp.lt.s32.totalorder %s32, 1
        %s435 = scalar_select %p434, %s32, 1
        %s436 = smul.addr %s435, 8
        %s437 = scalar_lea.vmem %s0, %s436
        %p438 = pneg %p61
        %p439 = pneg %p58
        %p440 = pneg %p82
        %p441 = pneg %p79
        %p442 = pneg %p103
        %p443 = pneg %p100
        %p444 = pneg %p124
        %p445 = pneg %p121
        %p446 = pneg %p145
        %p447 = pneg %p142
        %p448 = pneg %p166
        %p449 = pneg %p163
        %p450 = pneg %p187
        %p451 = pneg %p184
        %p452 = pneg %p208
        %p453 = pneg %p205
        %p454 = pneg %p229
        %p455 = pneg %p226
        %p456 = pneg %p250
        %p457 = pneg %p247
        %p458 = pneg %p271
        %p459 = pneg %p268
        %p460 = pneg %p292
        %p461 = pneg %p289
        %p462 = pneg %p313
        %p463 = pneg %p310
        %p464 = pneg %p334
        %p465 = pneg %p331
        %p466 = pneg %p362
        %p467 = pneg %p359
        %s468 = sand.u32 %s349, 1
        %s469 = scalar_lea.sflag [#allocation5], %s468
        %s470 = sand.u32 %s349, 1
        %s471 = smul.addr %s470, 8
        %s472 = scalar_lea.vmem [#allocation4], %s471
        %p473 = scmp.lt.s32.totalorder %s32, 1
        %s474 = scalar_select %p473, %s32, 1
        %s475 = smul.addr %s474, 8
        %s476 = scalar_lea.vmem %s0, %s475
        %p478 = scmp.eq.s32.totalorder %s33, 0
        // Predicated region
        $region77: #{tpu_custom_call.1} parent=75 // pred_check
          %p479 = pneg %p478
        $region78: #{tpu_custom_call.1} parent=75 // pred_check_branch
          %481 = sbr.rel (%p479) target = $region80
        $region79: #{tpu_custom_call.1} parent=75 // pred_region
          %v482 = vld [vmem:[%s476] sm:$0xff]
          %v483 = vpack.c.bf16 %v482, %v482
          %v484 = vld [vmem:[%s2] sm:$0xf]
          %v485 = vld [vmem:[%s2 + $0x4] sm:$0xf]
          %v486 = vld [vmem:[%s2 + $0x8] sm:$0xf]
          %v487 = vld [vmem:[%s2 + $0xc] sm:$0xf]
          %v488 = vld [vmem:[%s2 + $0x10] sm:$0xf]
          %v489 = vld [vmem:[%s2 + $0x14] sm:$0xf]
          %v490 = vld [vmem:[%s2 + $0x18] sm:$0xf]
          %v491 = vld [vmem:[%s2 + $0x1c] sm:$0xf]
          %v492 = vld [vmem:[%s2 + $0x20] sm:$0xf]
          %v493 = vld [vmem:[%s2 + $0x24] sm:$0xf]
          %v494 = vld [vmem:[%s2 + $0x28] sm:$0xf]
          %v495 = vld [vmem:[%s2 + $0x2c] sm:$0xf]
          %v496 = vld [vmem:[%s2 + $0x30] sm:$0xf]
          %v497 = vld [vmem:[%s2 + $0x34] sm:$0xf]
          %v498 = vld [vmem:[%s2 + $0x38] sm:$0xf]
          %v499 = vld [vmem:[%s2 + $0x3c] sm:$0xf]
          %v504 = vunpack.c.l.b16 %v484
          %v505 = vunpack.c.l.b16 %v485
          %v506 = vunpack.c.l.b16 %v486
          %v507 = vunpack.c.l.b16 %v487
          %v508 = vpack.c.b16 %v505, %v504
          %v509 = vpack.c.b16 %v507, %v506
          %vm512 = vcmask 261120
          %v514 = vsel %vm512, %v483, 0
          %516 = vmatprep.subr.bf16.mxu0 0
          %517 = vmatpush1.bf16.msra.mxu0 %v508
          %518 = vmatprep.subr.bf16.mxu0 0
          %519 = vmatpush1.bf16.msra.mxu0 %v509
          %520 = vmatprep.subr.bf16.mxu0 0
          %521 = vmatpush1.bf16.msra.mxu0 0
          %522 = vmatprep.subr.bf16.mxu0 0
          %523 = vmatpush1.bf16.msra.mxu0 0
          %524 = vmatprep.subr.bf16.mxu0 0
          %525 = vmatpush1.bf16.msra.mxu0 0
          %526 = vmatprep.subr.bf16.mxu0 0
          %527 = vmatpush1.bf16.msra.mxu0 0
          %528 = vmatprep.subr.bf16.mxu0 0
          %529 = vmatpush1.bf16.msra.mxu0 0
          %530 = vmatprep.subr.bf16.mxu0 0
          %531 = vmatpush1.bf16.msra.mxu0 0
          %532 = vmatprep.subr.bf16.mxu0 0
          %533 = vmatpush1.bf16.msra.mxu0 0
          %534 = vmatprep.subr.bf16.mxu0 0
          %535 = vmatpush1.bf16.msra.mxu0 0
          %536 = vmatprep.subr.bf16.mxu0 0
          %537 = vmatpush1.bf16.msra.mxu0 0
          %538 = vmatprep.subr.bf16.mxu0 0
          %539 = vmatpush1.bf16.msra.mxu0 0
          %540 = vmatprep.subr.bf16.mxu0 0
          %541 = vmatpush1.bf16.msra.mxu0 0
          %542 = vmatprep.subr.bf16.mxu0 0
          %543 = vmatpush1.bf16.msra.mxu0 0
          %544 = vmatprep.subr.bf16.mxu0 0
          %545 = vmatpush1.bf16.msra.mxu0 0
          %546 = vmatprep.subr.bf16.mxu0 0
          %547 = vmatpush1.bf16.msra.mxu0 0
          %548 = vmatprep.mubr.bf16.mxu0 0
          %549 = vmatmul.mubr.bf16.gmra.mrb[0].mxu0 %v514
          %v550 = vpop.f32.mrb[0].mxu0
          %v551 = vadd.f32 0.0, %v550
          %v552 = vpop.f32.mrb[0].mxu0
          %v553 = vpop.f32.mrb[0].mxu0
          %v554 = vpop.f32.mrb[0].mxu0
          %555 = vdwg.mxu0
          %v560 = vunpack.c.l.b16 %v488
          %v561 = vunpack.c.l.b16 %v489
          %v562 = vunpack.c.l.b16 %v490
          %v563 = vunpack.c.l.b16 %v491
          %v564 = vpack.c.b16 %v561, %v560
          %v565 = vpack.c.b16 %v563, %v562
          %568 = vmatprep.subr.bf16.mxu0 0
          %569 = vmatpush1.bf16.msra.mxu0 %v564
          %570 = vmatprep.subr.bf16.mxu0 0
          %571 = vmatpush1.bf16.msra.mxu0 %v565
          %572 = vmatprep.subr.bf16.mxu0 0
          %573 = vmatpush1.bf16.msra.mxu0 0
          %574 = vmatprep.subr.bf16.mxu0 0
          %575 = vmatpush1.bf16.msra.mxu0 0
          %576 = vmatprep.subr.bf16.mxu0 0
          %577 = vmatpush1.bf16.msra.mxu0 0
          %578 = vmatprep.subr.bf16.mxu0 0
          %579 = vmatpush1.bf16.msra.mxu0 0
          %580 = vmatprep.subr.bf16.mxu0 0
          %581 = vmatpush1.bf16.msra.mxu0 0
          %582 = vmatprep.subr.bf16.mxu0 0
          %583 = vmatpush1.bf16.msra.mxu0 0
          %584 = vmatprep.subr.bf16.mxu0 0
          %585 = vmatpush1.bf16.msra.mxu0 0
          %586 = vmatprep.subr.bf16.mxu0 0
          %587 = vmatpush1.bf16.msra.mxu0 0
          %588 = vmatprep.subr.bf16.mxu0 0
          %589 = vmatpush1.bf16.msra.mxu0 0
          %590 = vmatprep.subr.bf16.mxu0 0
          %591 = vmatpush1.bf16.msra.mxu0 0
          %592 = vmatprep.subr.bf16.mxu0 0
          %593 = vmatpush1.bf16.msra.mxu0 0
          %594 = vmatprep.subr.bf16.mxu0 0
          %595 = vmatpush1.bf16.msra.mxu0 0
          %596 = vmatprep.subr.bf16.mxu0 0
          %597 = vmatpush1.bf16.msra.mxu0 0
          %598 = vmatprep.subr.bf16.mxu0 0
          %599 = vmatpush1.bf16.msra.mxu0 0
          %600 = vmatprep.mubr.bf16.mxu0 0
          %601 = vmatmul.mubr.bf16.gmra.mrb[0].mxu0 %v514
          %v602 = vpop.f32.mrb[0].mxu0
          %v603 = vadd.f32 0.0, %v602
          %v604 = vpop.f32.mrb[0].mxu0
          %v605 = vpop.f32.mrb[0].mxu0
          %v606 = vpop.f32.mrb[0].mxu0
          %607 = vdwg.mxu0
          %v612 = vunpack.c.l.b16 %v492
          %v613 = vunpack.c.l.b16 %v493
          %v614 = vunpack.c.l.b16 %v494
          %v615 = vunpack.c.l.b16 %v495
          %v616 = vpack.c.b16 %v613, %v612
          %v617 = vpack.c.b16 %v615, %v614
          %620 = vmatprep.subr.bf16.mxu0 0
          %621 = vmatpush1.bf16.msra.mxu0 %v616
          %622 = vmatprep.subr.bf16.mxu0 0
          %623 = vmatpush1.bf16.msra.mxu0 %v617
          %624 = vmatprep.subr.bf16.mxu0 0
          %625 = vmatpush1.bf16.msra.mxu0 0
          %626 = vmatprep.subr.bf16.mxu0 0
          %627 = vmatpush1.bf16.msra.mxu0 0
          %628 = vmatprep.subr.bf16.mxu0 0
          %629 = vmatpush1.bf16.msra.mxu0 0
          %630 = vmatprep.subr.bf16.mxu0 0
          %631 = vmatpush1.bf16.msra.mxu0 0
          %632 = vmatprep.subr.bf16.mxu0 0
          %633 = vmatpush1.bf16.msra.mxu0 0
          %634 = vmatprep.subr.bf16.mxu0 0
          %635 = vmatpush1.bf16.msra.mxu0 0
          %636 = vmatprep.subr.bf16.mxu0 0
          %637 = vmatpush1.bf16.msra.mxu0 0
          %638 = vmatprep.subr.bf16.mxu0 0
          %639 = vmatpush1.bf16.msra.mxu0 0
          %640 = vmatprep.subr.bf16.mxu0 0
          %641 = vmatpush1.bf16.msra.mxu0 0
          %642 = vmatprep.subr.bf16.mxu0 0
          %643 = vmatpush1.bf16.msra.mxu0 0
          %644 = vmatprep.subr.bf16.mxu0 0
          %645 = vmatpush1.bf16.msra.mxu0 0
          %646 = vmatprep.subr.bf16.mxu0 0
          %647 = vmatpush1.bf16.msra.mxu0 0
          %648 = vmatprep.subr.bf16.mxu0 0
          %649 = vmatpush1.bf16.msra.mxu0 0
          %650 = vmatprep.subr.bf16.mxu0 0
          %651 = vmatpush1.bf16.msra.mxu0 0
          %652 = vmatprep.mubr.bf16.mxu0 0
          %653 = vmatmul.mubr.bf16.gmra.mrb[0].mxu0 %v514
          %v654 = vpop.f32.mrb[0].mxu0
          %v655 = vadd.f32 0.0, %v654
          %v656 = vpop.f32.mrb[0].mxu0
          %v657 = vpop.f32.mrb[0].mxu0
          %v658 = vpop.f32.mrb[0].mxu0
          %659 = vdwg.mxu0
          %v664 = vunpack.c.l.b16 %v496
          %v665 = vunpack.c.l.b16 %v497
          %v666 = vunpack.c.l.b16 %v498
          %v667 = vunpack.c.l.b16 %v499
          %v668 = vpack.c.b16 %v665, %v664
          %v669 = vpack.c.b16 %v667, %v666
          %672 = vmatprep.subr.bf16.mxu0 0
          %673 = vmatpush1.bf16.msra.mxu0 %v668
          %674 = vmatprep.subr.bf16.mxu0 0
          %675 = vmatpush1.bf16.msra.mxu0 %v669
          %676 = vmatprep.subr.bf16.mxu0 0
          %677 = vmatpush1.bf16.msra.mxu0 0
          %678 = vmatprep.subr.bf16.mxu0 0
          %679 = vmatpush1.bf16.msra.mxu0 0
          %680 = vmatprep.subr.bf16.mxu0 0
          %681 = vmatpush1.bf16.msra.mxu0 0
          %682 = vmatprep.subr.bf16.mxu0 0
          %683 = vmatpush1.bf16.msra.mxu0 0
          %684 = vmatprep.subr.bf16.mxu0 0
          %685 = vmatpush1.bf16.msra.mxu0 0
          %686 = vmatprep.subr.bf16.mxu0 0
          %687 = vmatpush1.bf16.msra.mxu0 0
          %688 = vmatprep.subr.bf16.mxu0 0
          %689 = vmatpush1.bf16.msra.mxu0 0
          %690 = vmatprep.subr.bf16.mxu0 0
          %691 = vmatpush1.bf16.msra.mxu0 0
          %692 = vmatprep.subr.bf16.mxu0 0
          %693 = vmatpush1.bf16.msra.mxu0 0
          %694 = vmatprep.subr.bf16.mxu0 0
          %695 = vmatpush1.bf16.msra.mxu0 0
          %696 = vmatprep.subr.bf16.mxu0 0
          %697 = vmatpush1.bf16.msra.mxu0 0
          %698 = vmatprep.subr.bf16.mxu0 0
          %699 = vmatpush1.bf16.msra.mxu0 0
          %700 = vmatprep.subr.bf16.mxu0 0
          %701 = vmatpush1.bf16.msra.mxu0 0
          %702 = vmatprep.subr.bf16.mxu0 0
          %703 = vmatpush1.bf16.msra.mxu0 0
          %704 = vmatprep.mubr.bf16.mxu0 0
          %705 = vmatmul.mubr.bf16.gmra.mrb[0].mxu0 %v514
          %v706 = vpop.f32.mrb[0].mxu0
          %v707 = vadd.f32 0.0, %v706
          %v708 = vpop.f32.mrb[0].mxu0
          %v709 = vpop.f32.mrb[0].mxu0
          %v710 = vpop.f32.mrb[0].mxu0
          %711 = vdwg.mxu0
          %v712 = vpack.c.bf16 %v551, %v551
          %v713 = vpack.c.bf16 %v603, %v603
          %v714 = vpack.c.bf16 %v655, %v655
          %v715 = vpack.c.bf16 %v707, %v707
          %vm716 = vcmask 60416
          %717 = vst.msk [vmem:[#allocation2] sm:$0xf] %vm716, %v712
          %718 = vst.msk [vmem:[#allocation2 + $0x4] sm:$0xf] %vm716, %v713
          %719 = vst.msk [vmem:[#allocation2 + $0x8] sm:$0xf] %vm716, %v714
          %720 = vst.msk [vmem:[#allocation2 + $0xc] sm:$0xf] %vm716, %v715
          %v721 = vld [vmem:[%s3] sm:$0xf]
          %v722 = vld [vmem:[%s3 + $0x4] sm:$0xf]
          %v723 = vld [vmem:[%s3 + $0x8] sm:$0xf]
          %v724 = vld [vmem:[%s3 + $0xc] sm:$0xf]
          %v725 = vld [vmem:[%s3 + $0x10] sm:$0xf]
          %v726 = vld [vmem:[%s3 + $0x14] sm:$0xf]
          %v727 = vld [vmem:[%s3 + $0x18] sm:$0xf]
          %v728 = vld [vmem:[%s3 + $0x1c] sm:$0xf]
          %v729 = vld [vmem:[%s3 + $0x20] sm:$0xf]
          %v730 = vld [vmem:[%s3 + $0x24] sm:$0xf]
          %v731 = vld [vmem:[%s3 + $0x28] sm:$0xf]
          %v732 = vld [vmem:[%s3 + $0x2c] sm:$0xf]
          %v733 = vld [vmem:[%s3 + $0x30] sm:$0xf]
          %v734 = vld [vmem:[%s3 + $0x34] sm:$0xf]
          %v735 = vld [vmem:[%s3 + $0x38] sm:$0xf]
          %v736 = vld [vmem:[%s3 + $0x3c] sm:$0xf]
          %v741 = vunpack.c.l.b16 %v721
          %v742 = vunpack.c.l.b16 %v722
          %v743 = vunpack.c.l.b16 %v723
          %v744 = vunpack.c.l.b16 %v724
          %v745 = vpack.c.b16 %v742, %v741
          %v746 = vpack.c.b16 %v744, %v743
          %749 = vmatprep.subr.bf16.mxu0 0
          %750 = vmatpush1.bf16.msra.mxu0 %v745
          %751 = vmatprep.subr.bf16.mxu0 0
          %752 = vmatpush1.bf16.msra.mxu0 %v746
          %753 = vmatprep.subr.bf16.mxu0 0
          %754 = vmatpush1.bf16.msra.mxu0 0
          %755 = vmatprep.subr.bf16.mxu0 0
          %756 = vmatpush1.bf16.msra.mxu0 0
          %757 = vmatprep.subr.bf16.mxu0 0
          %758 = vmatpush1.bf16.msra.mxu0 0
          %759 = vmatprep.subr.bf16.mxu0 0
          %760 = vmatpush1.bf16.msra.mxu0 0
          %761 = vmatprep.subr.bf16.mxu0 0
          %762 = vmatpush1.bf16.msra.mxu0 0
          %763 = vmatprep.subr.bf16.mxu0 0
          %764 = vmatpush1.bf16.msra.mxu0 0
          %765 = vmatprep.subr.bf16.mxu0 0
          %766 = vmatpush1.bf16.msra.mxu0 0
          %767 = vmatprep.subr.bf16.mxu0 0
          %768 = vmatpush1.bf16.msra.mxu0 0
          %769 = vmatprep.subr.bf16.mxu0 0
          %770 = vmatpush1.bf16.msra.mxu0 0
          %771 = vmatprep.subr.bf16.mxu0 0
          %772 = vmatpush1.bf16.msra.mxu0 0
          %773 = vmatprep.subr.bf16.mxu0 0
          %774 = vmatpush1.bf16.msra.mxu0 0
          %775 = vmatprep.subr.bf16.mxu0 0
          %776 = vmatpush1.bf16.msra.mxu0 0
          %777 = vmatprep.subr.bf16.mxu0 0
          %778 = vmatpush1.bf16.msra.mxu0 0
          %779 = vmatprep.subr.bf16.mxu0 0
          %780 = vmatpush1.bf16.msra.mxu0 0
          %781 = vmatprep.mubr.bf16.mxu0 0
          %782 = vmatmul.mubr.bf16.gmra.mrb[0].mxu0 %v514
          %v783 = vpop.f32.mrb[0].mxu0
          %v784 = vadd.f32 0.0, %v783
          %v785 = vpop.f32.mrb[0].mxu0
          %v786 = vpop.f32.mrb[0].mxu0
          %v787 = vpop.f32.mrb[0].mxu0
          %788 = vdwg.mxu0
          %v793 = vunpack.c.l.b16 %v725
          %v794 = vunpack.c.l.b16 %v726
          %v795 = vunpack.c.l.b16 %v727
          %v796 = vunpack.c.l.b16 %v728
          %v797 = vpack.c.b16 %v794, %v793
          %v798 = vpack.c.b16 %v796, %v795
          %801 = vmatprep.subr.bf16.mxu0 0
          %802 = vmatpush1.bf16.msra.mxu0 %v797
          %803 = vmatprep.subr.bf16.mxu0 0
          %804 = vmatpush1.bf16.msra.mxu0 %v798
          %805 = vmatprep.subr.bf16.mxu0 0
          %806 = vmatpush1.bf16.msra.mxu0 0
          %807 = vmatprep.subr.bf16.mxu0 0
          %808 = vmatpush1.bf16.msra.mxu0 0
          %809 = vmatprep.subr.bf16.mxu0 0
          %810 = vmatpush1.bf16.msra.mxu0 0
          %811 = vmatprep.subr.bf16.mxu0 0
          %812 = vmatpush1.bf16.msra.mxu0 0
          %813 = vmatprep.subr.bf16.mxu0 0
          %814 = vmatpush1.bf16.msra.mxu0 0
          %815 = vmatprep.subr.bf16.mxu0 0
          %816 = vmatpush1.bf16.msra.mxu0 0
          %817 = vmatprep.subr.bf16.mxu0 0
          %818 = vmatpush1.bf16.msra.mxu0 0
          %819 = vmatprep.subr.bf16.mxu0 0
          %820 = vmatpush1.bf16.msra.mxu0 0
          %821 = vmatprep.subr.bf16.mxu0 0
          %822 = vmatpush1.bf16.msra.mxu0 0
          %823 = vmatprep.subr.bf16.mxu0 0
          %824 = vmatpush1.bf16.msra.mxu0 0
          %825 = vmatprep.subr.bf16.mxu0 0
          %826 = vmatpush1.bf16.msra.mxu0 0
          %827 = vmatprep.subr.bf16.mxu0 0
          %828 = vmatpush1.bf16.msra.mxu0 0
          %829 = vmatprep.subr.bf16.mxu0 0
          %830 = vmatpush1.bf16.msra.mxu0 0
          %831 = vmatprep.subr.bf16.mxu0 0
          %832 = vmatpush1.bf16.msra.mxu0 0
          %833 = vmatprep.mubr.bf16.mxu0 0
          %834 = vmatmul.mubr.bf16.gmra.mrb[0].mxu0 %v514
          %v835 = vpop.f32.mrb[0].mxu0
          %v836 = vadd.f32 0.0, %v835
          %v837 = vpop.f32.mrb[0].mxu0
          %v838 = vpop.f32.mrb[0].mxu0
          %v839 = vpop.f32.mrb[0].mxu0
          %840 = vdwg.mxu0
          %v845 = vunpack.c.l.b16 %v729
          %v846 = vunpack.c.l.b16 %v730
          %v847 = vunpack.c.l.b16 %v731
          %v848 = vunpack.c.l.b16 %v732
          %v849 = vpack.c.b16 %v846, %v845
          %v850 = vpack.c.b16 %v848, %v847
          %853 = vmatprep.subr.bf16.mxu0 0
          %854 = vmatpush1.bf16.msra.mxu0 %v849
          %855 = vmatprep.subr.bf16.mxu0 0
          %856 = vmatpush1.bf16.msra.mxu0 %v850
          %857 = vmatprep.subr.bf16.mxu0 0
          %858 = vmatpush1.bf16.msra.mxu0 0
          %859 = vmatprep.subr.bf16.mxu0 0
          %860 = vmatpush1.bf16.msra.mxu0 0
          %861 = vmatprep.subr.bf16.mxu0 0
          %862 = vmatpush1.bf16.msra.mxu0 0
          %863 = vmatprep.subr.bf16.mxu0 0
          %864 = vmatpush1.bf16.msra.mxu0 0
          %865 = vmatprep.subr.bf16.mxu0 0
          %866 = vmatpush1.bf16.msra.mxu0 0
          %867 = vmatprep.subr.bf16.mxu0 0
          %868 = vmatpush1.bf16.msra.mxu0 0
          %869 = vmatprep.subr.bf16.mxu0 0
          %870 = vmatpush1.bf16.msra.mxu0 0
          %871 = vmatprep.subr.bf16.mxu0 0
          %872 = vmatpush1.bf16.msra.mxu0 0
          %873 = vmatprep.subr.bf16.mxu0 0
          %874 = vmatpush1.bf16.msra.mxu0 0
          %875 = vmatprep.subr.bf16.mxu0 0
          %876 = vmatpush1.bf16.msra.mxu0 0
          %877 = vmatprep.subr.bf16.mxu0 0
          %878 = vmatpush1.bf16.msra.mxu0 0
          %879 = vmatprep.subr.bf16.mxu0 0
          %880 = vmatpush1.bf16.msra.mxu0 0
          %881 = vmatprep.subr.bf16.mxu0 0
          %882 = vmatpush1.bf16.msra.mxu0 0
          %883 = vmatprep.subr.bf16.mxu0 0
          %884 = vmatpush1.bf16.msra.mxu0 0
          %885 = vmatprep.mubr.bf16.mxu0 0
          %886 = vmatmul.mubr.bf16.gmra.mrb[0].mxu0 %v514
          %v887 = vpop.f32.mrb[0].mxu0
          %v888 = vadd.f32 0.0, %v887
          %v889 = vpop.f32.mrb[0].mxu0
          %v890 = vpop.f32.mrb[0].mxu0
          %v891 = vpop.f32.mrb[0].mxu0
          %892 = vdwg.mxu0
          %v897 = vunpack.c.l.b16 %v733
          %v898 = vunpack.c.l.b16 %v734
          %v899 = vunpack.c.l.b16 %v735
          %v900 = vunpack.c.l.b16 %v736
          %v901 = vpack.c.b16 %v898, %v897
          %v902 = vpack.c.b16 %v900, %v899
          %905 = vmatprep.subr.bf16.mxu0 0
          %906 = vmatpush1.bf16.msra.mxu0 %v901
          %907 = vmatprep.subr.bf16.mxu0 0
          %908 = vmatpush1.bf16.msra.mxu0 %v902
          %909 = vmatprep.subr.bf16.mxu0 0
          %910 = vmatpush1.bf16.msra.mxu0 0
          %911 = vmatprep.subr.bf16.mxu0 0
          %912 = vmatpush1.bf16.msra.mxu0 0
          %913 = vmatprep.subr.bf16.mxu0 0
          %914 = vmatpush1.bf16.msra.mxu0 0
          %915 = vmatprep.subr.bf16.mxu0 0
          %916 = vmatpush1.bf16.msra.mxu0 0
          %917 = vmatprep.subr.bf16.mxu0 0
          %918 = vmatpush1.bf16.msra.mxu0 0
          %919 = vmatprep.subr.bf16.mxu0 0
          %920 = vmatpush1.bf16.msra.mxu0 0
          %921 = vmatprep.subr.bf16.mxu0 0
          %922 = vmatpush1.bf16.msra.mxu0 0
          %923 = vmatprep.subr.bf16.mxu0 0
          %924 = vmatpush1.bf16.msra.mxu0 0
          %925 = vmatprep.subr.bf16.mxu0 0
          %926 = vmatpush1.bf16.msra.mxu0 0
          %927 = vmatprep.subr.bf16.mxu0 0
          %928 = vmatpush1.bf16.msra.mxu0 0
          %929 = vmatprep.subr.bf16.mxu0 0
          %930 = vmatpush1.bf16.msra.mxu0 0
          %931 = vmatprep.subr.bf16.mxu0 0
          %932 = vmatpush1.bf16.msra.mxu0 0
          %933 = vmatprep.subr.bf16.mxu0 0
          %934 = vmatpush1.bf16.msra.mxu0 0
          %935 = vmatprep.subr.bf16.mxu0 0
          %936 = vmatpush1.bf16.msra.mxu0 0
          %937 = vmatprep.mubr.bf16.mxu0 0
          %938 = vmatmul.mubr.bf16.gmra.mrb[0].mxu0 %v514
          %v939 = vpop.f32.mrb[0].mxu0
          %v940 = vadd.f32 0.0, %v939
          %v941 = vpop.f32.mrb[0].mxu0
          %v942 = vpop.f32.mrb[0].mxu0
          %v943 = vpop.f32.mrb[0].mxu0
          %944 = vdwg.mxu0
          %v945 = vpack.c.bf16 %v784, %v784
          %v946 = vpack.c.bf16 %v836, %v836
          %v947 = vpack.c.bf16 %v888, %v888
          %v948 = vpack.c.bf16 %v940, %v940
          %949 = vst.msk [vmem:[#allocation3] sm:$0xf] %vm716, %v945
          %950 = vst.msk [vmem:[#allocation3 + $0x4] sm:$0xf] %vm716, %v946
          %951 = vst.msk [vmem:[#allocation3 + $0x8] sm:$0xf] %vm716, %v947
          %952 = vst.msk [vmem:[#allocation3 + $0xc] sm:$0xf] %vm716, %v948
        $region80: #{tpu_custom_call.1} parent=75 // pred_fallthru
          _
        %s953 = smul.u32 %s33, 8
        %s954 = scalar_lea.vmem %s476, %s953
        %v955 = vld [vmem:[%s954] sm:$0xff]
        %v956 = vpack.c.bf16 %v955, %v955
        %v957 = vld [vmem:[%s1] sm:$0xf]
        %v958 = vld [vmem:[%s1 + $0x4] sm:$0xf]
        %v959 = vld [vmem:[%s1 + $0x8] sm:$0xf]
        %v960 = vld [vmem:[%s1 + $0xc] sm:$0xf]
        %v961 = vld [vmem:[%s1 + $0x10] sm:$0xf]
        %v962 = vld [vmem:[%s1 + $0x14] sm:$0xf]
        %v963 = vld [vmem:[%s1 + $0x18] sm:$0xf]
        %v964 = vld [vmem:[%s1 + $0x1c] sm:$0xf]
        %v965 = vld [vmem:[%s1 + $0x20] sm:$0xf]
        %v966 = vld [vmem:[%s1 + $0x24] sm:$0xf]
        %v967 = vld [vmem:[%s1 + $0x28] sm:$0xf]
        %v968 = vld [vmem:[%s1 + $0x2c] sm:$0xf]
        %v969 = vld [vmem:[%s1 + $0x30] sm:$0xf]
        %v970 = vld [vmem:[%s1 + $0x34] sm:$0xf]
        %v971 = vld [vmem:[%s1 + $0x38] sm:$0xf]
        %v972 = vld [vmem:[%s1 + $0x3c] sm:$0xf]
        %v977 = vunpack.c.l.b16 %v957
        %v978 = vunpack.c.l.b16 %v958
        %v979 = vunpack.c.l.b16 %v959
        %v980 = vunpack.c.l.b16 %v960
        %v981 = vpack.c.b16 %v978, %v977
        %v982 = vpack.c.b16 %v980, %v979
        %vm985 = vcmask 261120
        %v987 = vsel %vm985, %v956, 0
        %989 = vmatprep.subr.bf16.mxu0 0
        %990 = vmatpush1.bf16.msra.mxu0 %v981
        %991 = vmatprep.subr.bf16.mxu0 0
        %992 = vmatpush1.bf16.msra.mxu0 %v982
        %993 = vmatprep.subr.bf16.mxu0 0
        %994 = vmatpush1.bf16.msra.mxu0 0
        %995 = vmatprep.subr.bf16.mxu0 0
        %996 = vmatpush1.bf16.msra.mxu0 0
        %997 = vmatprep.subr.bf16.mxu0 0
        %998 = vmatpush1.bf16.msra.mxu0 0
        %999 = vmatprep.subr.bf16.mxu0 0
        %1000 = vmatpush1.bf16.msra.mxu0 0
        %1001 = vmatprep.subr.bf16.mxu0 0
        %1002 = vmatpush1.bf16.msra.mxu0 0
        %1003 = vmatprep.subr.bf16.mxu0 0
        %1004 = vmatpush1.bf16.msra.mxu0 0
        %1005 = vmatprep.subr.bf16.mxu0 0
        %1006 = vmatpush1.bf16.msra.mxu0 0
        %1007 = vmatprep.subr.bf16.mxu0 0
        %1008 = vmatpush1.bf16.msra.mxu0 0
        %1009 = vmatprep.subr.bf16.mxu0 0
        %1010 = vmatpush1.bf16.msra.mxu0 0
        %1011 = vmatprep.subr.bf16.mxu0 0
        %1012 = vmatpush1.bf16.msra.mxu0 0
        %1013 = vmatprep.subr.bf16.mxu0 0
        %1014 = vmatpush1.bf16.msra.mxu0 0
        %1015 = vmatprep.subr.bf16.mxu0 0
        %1016 = vmatpush1.bf16.msra.mxu0 0
        %1017 = vmatprep.subr.bf16.mxu0 0
        %1018 = vmatpush1.bf16.msra.mxu0 0
        %1019 = vmatprep.subr.bf16.mxu0 0
        %1020 = vmatpush1.bf16.msra.mxu0 0
        %1021 = vmatprep.mubr.bf16.mxu0 0
        %1022 = vmatmul.mubr.bf16.gmra.mrb[0].mxu0 %v987
        %v1023 = vpop.f32.mrb[0].mxu0
        %v1024 = vadd.f32 0.0, %v1023
        %v1025 = vpop.f32.mrb[0].mxu0
        %v1026 = vpop.f32.mrb[0].mxu0
        %v1027 = vpop.f32.mrb[0].mxu0
        %1028 = vdwg.mxu0
        %v1033 = vunpack.c.l.b16 %v961
        %v1034 = vunpack.c.l.b16 %v962
        %v1035 = vunpack.c.l.b16 %v963
        %v1036 = vunpack.c.l.b16 %v964
        %v1037 = vpack.c.b16 %v1034, %v1033
        %v1038 = vpack.c.b16 %v1036, %v1035
        %1041 = vmatprep.subr.bf16.mxu0 0
        %1042 = vmatpush1.bf16.msra.mxu0 %v1037
        %1043 = vmatprep.subr.bf16.mxu0 0
        %1044 = vmatpush1.bf16.msra.mxu0 %v1038
        %1045 = vmatprep.subr.bf16.mxu0 0
        %1046 = vmatpush1.bf16.msra.mxu0 0
        %1047 = vmatprep.subr.bf16.mxu0 0
        %1048 = vmatpush1.bf16.msra.mxu0 0
        %1049 = vmatprep.subr.bf16.mxu0 0
        %1050 = vmatpush1.bf16.msra.mxu0 0
        %1051 = vmatprep.subr.bf16.mxu0 0
        %1052 = vmatpush1.bf16.msra.mxu0 0
        %1053 = vmatprep.subr.bf16.mxu0 0
        %1054 = vmatpush1.bf16.msra.mxu0 0
        %1055 = vmatprep.subr.bf16.mxu0 0
        %1056 = vmatpush1.bf16.msra.mxu0 0
        %1057 = vmatprep.subr.bf16.mxu0 0
        %1058 = vmatpush1.bf16.msra.mxu0 0
        %1059 = vmatprep.subr.bf16.mxu0 0
        %1060 = vmatpush1.bf16.msra.mxu0 0
        %1061 = vmatprep.subr.bf16.mxu0 0
        %1062 = vmatpush1.bf16.msra.mxu0 0
        %1063 = vmatprep.subr.bf16.mxu0 0
        %1064 = vmatpush1.bf16.msra.mxu0 0
        %1065 = vmatprep.subr.bf16.mxu0 0
        %1066 = vmatpush1.bf16.msra.mxu0 0
        %1067 = vmatprep.subr.bf16.mxu0 0
        %1068 = vmatpush1.bf16.msra.mxu0 0
        %1069 = vmatprep.subr.bf16.mxu0 0
        %1070 = vmatpush1.bf16.msra.mxu0 0
        %1071 = vmatprep.subr.bf16.mxu0 0
        %1072 = vmatpush1.bf16.msra.mxu0 0
        %1073 = vmatprep.mubr.bf16.mxu0 0
        %1074 = vmatmul.mubr.bf16.gmra.mrb[0].mxu0 %v987
        %v1075 = vpop.f32.mrb[0].mxu0
        %v1076 = vadd.f32 0.0, %v1075
        %v1077 = vpop.f32.mrb[0].mxu0
        %v1078 = vpop.f32.mrb[0].mxu0
        %v1079 = vpop.f32.mrb[0].mxu0
        %1080 = vdwg.mxu0
        %v1085 = vunpack.c.l.b16 %v965
        %v1086 = vunpack.c.l.b16 %v966
        %v1087 = vunpack.c.l.b16 %v967
        %v1088 = vunpack.c.l.b16 %v968
        %v1089 = vpack.c.b16 %v1086, %v1085
        %v1090 = vpack.c.b16 %v1088, %v1087
        %1093 = vmatprep.subr.bf16.mxu0 0
        %1094 = vmatpush1.bf16.msra.mxu0 %v1089
        %1095 = vmatprep.subr.bf16.mxu0 0
        %1096 = vmatpush1.bf16.msra.mxu0 %v1090
        %1097 = vmatprep.subr.bf16.mxu0 0
        %1098 = vmatpush1.bf16.msra.mxu0 0
        %1099 = vmatprep.subr.bf16.mxu0 0
        %1100 = vmatpush1.bf16.msra.mxu0 0
        %1101 = vmatprep.subr.bf16.mxu0 0
        %1102 = vmatpush1.bf16.msra.mxu0 0
        %1103 = vmatprep.subr.bf16.mxu0 0
        %1104 = vmatpush1.bf16.msra.mxu0 0
        %1105 = vmatprep.subr.bf16.mxu0 0
        %1106 = vmatpush1.bf16.msra.mxu0 0
        %1107 = vmatprep.subr.bf16.mxu0 0
        %1108 = vmatpush1.bf16.msra.mxu0 0
        %1109 = vmatprep.subr.bf16.mxu0 0
        %1110 = vmatpush1.bf16.msra.mxu0 0
        %1111 = vmatprep.subr.bf16.mxu0 0
        %1112 = vmatpush1.bf16.msra.mxu0 0
        %1113 = vmatprep.subr.bf16.mxu0 0
        %1114 = vmatpush1.bf16.msra.mxu0 0
        %1115 = vmatprep.subr.bf16.mxu0 0
        %1116 = vmatpush1.bf16.msra.mxu0 0
        %1117 = vmatprep.subr.bf16.mxu0 0
        %1118 = vmatpush1.bf16.msra.mxu0 0
        %1119 = vmatprep.subr.bf16.mxu0 0
        %1120 = vmatpush1.bf16.msra.mxu0 0
        %1121 = vmatprep.subr.bf16.mxu0 0
        %1122 = vmatpush1.bf16.msra.mxu0 0
        %1123 = vmatprep.subr.bf16.mxu0 0
        %1124 = vmatpush1.bf16.msra.mxu0 0
        %1125 = vmatprep.mubr.bf16.mxu0 0
        %1126 = vmatmul.mubr.bf16.gmra.mrb[0].mxu0 %v987
        %v1127 = vpop.f32.mrb[0].mxu0
        %v1128 = vadd.f32 0.0, %v1127
        %v1129 = vpop.f32.mrb[0].mxu0
        %v1130 = vpop.f32.mrb[0].mxu0
        %v1131 = vpop.f32.mrb[0].mxu0
        %1132 = vdwg.mxu0
        %v1137 = vunpack.c.l.b16 %v969
        %v1138 = vunpack.c.l.b16 %v970
        %v1139 = vunpack.c.l.b16 %v971
        %v1140 = vunpack.c.l.b16 %v972
        %v1141 = vpack.c.b16 %v1138, %v1137
        %v1142 = vpack.c.b16 %v1140, %v1139
        %1145 = vmatprep.subr.bf16.mxu0 0
        %1146 = vmatpush1.bf16.msra.mxu0 %v1141
        %1147 = vmatprep.subr.bf16.mxu0 0
        %1148 = vmatpush1.bf16.msra.mxu0 %v1142
        %1149 = vmatprep.subr.bf16.mxu0 0
        %1150 = vmatpush1.bf16.msra.mxu0 0
        %1151 = vmatprep.subr.bf16.mxu0 0
        %1152 = vmatpush1.bf16.msra.mxu0 0
        %1153 = vmatprep.subr.bf16.mxu0 0
        %1154 = vmatpush1.bf16.msra.mxu0 0
        %1155 = vmatprep.subr.bf16.mxu0 0
        %1156 = vmatpush1.bf16.msra.mxu0 0
        %1157 = vmatprep.subr.bf16.mxu0 0
        %1158 = vmatpush1.bf16.msra.mxu0 0
        %1159 = vmatprep.subr.bf16.mxu0 0
        %1160 = vmatpush1.bf16.msra.mxu0 0
        %1161 = vmatprep.subr.bf16.mxu0 0
        %1162 = vmatpush1.bf16.msra.mxu0 0
        %1163 = vmatprep.subr.bf16.mxu0 0
        %1164 = vmatpush1.bf16.msra.mxu0 0
        %1165 = vmatprep.subr.bf16.mxu0 0
        %1166 = vmatpush1.bf16.msra.mxu0 0
        %1167 = vmatprep.subr.bf16.mxu0 0
        %1168 = vmatpush1.bf16.msra.mxu0 0
        %1169 = vmatprep.subr.bf16.mxu0 0
        %1170 = vmatpush1.bf16.msra.mxu0 0
        %1171 = vmatprep.subr.bf16.mxu0 0
        %1172 = vmatpush1.bf16.msra.mxu0 0
        %1173 = vmatprep.subr.bf16.mxu0 0
        %1174 = vmatpush1.bf16.msra.mxu0 0
        %1175 = vmatprep.subr.bf16.mxu0 0
        %1176 = vmatpush1.bf16.msra.mxu0 0
        %1177 = vmatprep.mubr.bf16.mxu0 0
        %1178 = vmatmul.mubr.bf16.gmra.mrb[0].mxu0 %v987
        %v1179 = vpop.f32.mrb[0].mxu0
        %v1180 = vadd.f32 0.0, %v1179
        %v1181 = vpop.f32.mrb[0].mxu0
        %v1182 = vpop.f32.mrb[0].mxu0
        %v1183 = vpop.f32.mrb[0].mxu0
        %1184 = vdwg.mxu0
        %v1185 = vpack.c.bf16 %v1024, %v1024
        %v1186 = vpack.c.bf16 %v1076, %v1076
        %v1187 = vpack.c.bf16 %v1128, %v1128
        %v1188 = vpack.c.bf16 %v1180, %v1180
        %v1189 = vld [vmem:[#allocation2] sm:$0xf]
        %v1190 = vld [vmem:[#allocation2 + $0x4] sm:$0xf]
        %v1191 = vld [vmem:[#allocation2 + $0x8] sm:$0xf]
        %v1192 = vld [vmem:[#allocation2 + $0xc] sm:$0xf]
        %vm1193 = vcmask 64512
        %v1195 = vsel %vm1193, %v1185, 0
        %v1198 = vsel %vm1193, %v1189, 0
        %1200 = vmatprep.subr.bf16.mxu0 0
        %1201 = vmatpush1.bf16.xpose.msra.mxu0 %v1198
        %1202 = vmatprep.subr.bf16.mxu0 0
        %1203 = vmatpush1.bf16.xpose.msra.mxu0 0
        %1204 = vmatprep.subr.bf16.mxu0 0
        %1205 = vmatpush1.bf16.xpose.msra.mxu0 0
        %1206 = vmatprep.subr.bf16.mxu0 0
        %1207 = vmatpush1.bf16.xpose.msra.mxu0 0
        %1208 = vmatprep.subr.bf16.mxu0 0
        %1209 = vmatpush1.bf16.xpose.msra.mxu0 0
        %1210 = vmatprep.subr.bf16.mxu0 0
        %1211 = vmatpush1.bf16.xpose.msra.mxu0 0
        %1212 = vmatprep.subr.bf16.mxu0 0
        %1213 = vmatpush1.bf16.xpose.msra.mxu0 0
        %1214 = vmatprep.subr.bf16.mxu0 0
        %1215 = vmatpush1.bf16.xpose.msra.mxu0 0
        %1216 = vmatprep.subr.bf16.mxu0 0
        %1217 = vmatpush1.bf16.xpose.msra.mxu0 0
        %1218 = vmatprep.subr.bf16.mxu0 0
        %1219 = vmatpush1.bf16.xpose.msra.mxu0 0
        %1220 = vmatprep.subr.bf16.mxu0 0
        %1221 = vmatpush1.bf16.xpose.msra.mxu0 0
        %1222 = vmatprep.subr.bf16.mxu0 0
        %1223 = vmatpush1.bf16.xpose.msra.mxu0 0
        %1224 = vmatprep.subr.bf16.mxu0 0
        %1225 = vmatpush1.bf16.xpose.msra.mxu0 0
        %1226 = vmatprep.subr.bf16.mxu0 0
        %1227 = vmatpush1.bf16.xpose.msra.mxu0 0
        %1228 = vmatprep.subr.bf16.mxu0 0
        %1229 = vmatpush1.bf16.xpose.msra.mxu0 0
        %1230 = vmatprep.subr.bf16.mxu0 0
        %1231 = vmatpush1.bf16.xpose.msra.mxu0 0
        %1232 = vmatprep.mubr.bf16.mxu0 0
        %1233 = vmatmul.mubr.bf16.gmra.mrb[0].mxu0 %v1195
        %v1234 = vpop.f32.mrb[0].mxu0
        %v1235 = vadd.f32 0.0, %v1234
        %v1236 = vpop.f32.mrb[0].mxu0
        %v1237 = vpop.f32.mrb[0].mxu0
        %v1238 = vpop.f32.mrb[0].mxu0
        %1239 = vdwg.mxu0
        %v1241 = vsel %vm1193, %v1186, 0
        %v1244 = vsel %vm1193, %v1190, 0
        %1246 = vmatprep.subr.bf16.mxu0 0
        %1247 = vmatpush1.bf16.xpose.msra.mxu0 %v1244
        %1248 = vmatprep.subr.bf16.mxu0 0
        %1249 = vmatpush1.bf16.xpose.msra.mxu0 0
        %1250 = vmatprep.subr.bf16.mxu0 0
        %1251 = vmatpush1.bf16.xpose.msra.mxu0 0
        %1252 = vmatprep.subr.bf16.mxu0 0
        %1253 = vmatpush1.bf16.xpose.msra.mxu0 0
        %1254 = vmatprep.subr.bf16.mxu0 0
        %1255 = vmatpush1.bf16.xpose.msra.mxu0 0
        %1256 = vmatprep.subr.bf16.mxu0 0
        %1257 = vmatpush1.bf16.xpose.msra.mxu0 0
        %1258 = vmatprep.subr.bf16.mxu0 0
        %1259 = vmatpush1.bf16.xpose.msra.mxu0 0
        %1260 = vmatprep.subr.bf16.mxu0 0
        %1261 = vmatpush1.bf16.xpose.msra.mxu0 0
        %1262 = vmatprep.subr.bf16.mxu0 0
        %1263 = vmatpush1.bf16.xpose.msra.mxu0 0
        %1264 = vmatprep.subr.bf16.mxu0 0
        %1265 = vmatpush1.bf16.xpose.msra.mxu0 0
        %1266 = vmatprep.subr.bf16.mxu0 0
        %1267 = vmatpush1.bf16.xpose.msra.mxu0 0
        %1268 = vmatprep.subr.bf16.mxu0 0
        %1269 = vmatpush1.bf16.xpose.msra.mxu0 0
        %1270 = vmatprep.subr.bf16.mxu0 0
        %1271 = vmatpush1.bf16.xpose.msra.mxu0 0
        %1272 = vmatprep.subr.bf16.mxu0 0
        %1273 = vmatpush1.bf16.xpose.msra.mxu0 0
        %1274 = vmatprep.subr.bf16.mxu0 0
        %1275 = vmatpush1.bf16.xpose.msra.mxu0 0
        %1276 = vmatprep.subr.bf16.mxu0 0
        %1277 = vmatpush1.bf16.xpose.msra.mxu0 0
        %1278 = vmatprep.mubr.bf16.mxu0 0
        %1279 = vmatmul.mubr.bf16.gmra.mrb[0].mxu0 %v1241
        %v1280 = vpop.f32.mrb[0].mxu0
        %v1281 = vadd.f32 0.0, %v1280
        %v1282 = vpop.f32.mrb[0].mxu0
        %v1283 = vpop.f32.mrb[0].mxu0
        %v1284 = vpop.f32.mrb[0].mxu0
        %1285 = vdwg.mxu0
        %v1287 = vsel %vm1193, %v1187, 0
        %v1290 = vsel %vm1193, %v1191, 0
        %1292 = vmatprep.subr.bf16.mxu0 0
        %1293 = vmatpush1.bf16.xpose.msra.mxu0 %v1290
        %1294 = vmatprep.subr.bf16.mxu0 0
        %1295 = vmatpush1.bf16.xpose.msra.mxu0 0
        %1296 = vmatprep.subr.bf16.mxu0 0
        %1297 = vmatpush1.bf16.xpose.msra.mxu0 0
        %1298 = vmatprep.subr.bf16.mxu0 0
        %1299 = vmatpush1.bf16.xpose.msra.mxu0 0
        %1300 = vmatprep.subr.bf16.mxu0 0
        %1301 = vmatpush1.bf16.xpose.msra.mxu0 0
        %1302 = vmatprep.subr.bf16.mxu0 0
        %1303 = vmatpush1.bf16.xpose.msra.mxu0 0
        %1304 = vmatprep.subr.bf16.mxu0 0
        %1305 = vmatpush1.bf16.xpose.msra.mxu0 0
        %1306 = vmatprep.subr.bf16.mxu0 0
        %1307 = vmatpush1.bf16.xpose.msra.mxu0 0
        %1308 = vmatprep.subr.bf16.mxu0 0
        %1309 = vmatpush1.bf16.xpose.msra.mxu0 0
        %1310 = vmatprep.subr.bf16.mxu0 0
        %1311 = vmatpush1.bf16.xpose.msra.mxu0 0
        %1312 = vmatprep.subr.bf16.mxu0 0
        %1313 = vmatpush1.bf16.xpose.msra.mxu0 0
        %1314 = vmatprep.subr.bf16.mxu0 0
        %1315 = vmatpush1.bf16.xpose.msra.mxu0 0
        %1316 = vmatprep.subr.bf16.mxu0 0
        %1317 = vmatpush1.bf16.xpose.msra.mxu0 0
        %1318 = vmatprep.subr.bf16.mxu0 0
        %1319 = vmatpush1.bf16.xpose.msra.mxu0 0
        %1320 = vmatprep.subr.bf16.mxu0 0
        %1321 = vmatpush1.bf16.xpose.msra.mxu0 0
        %1322 = vmatprep.subr.bf16.mxu0 0
        %1323 = vmatpush1.bf16.xpose.msra.mxu0 0
        %1324 = vmatprep.mubr.bf16.mxu0 0
        %1325 = vmatmul.mubr.bf16.gmra.mrb[0].mxu0 %v1287
        %v1326 = vpop.f32.mrb[0].mxu0
        %v1327 = vadd.f32 0.0, %v1326
        %v1328 = vpop.f32.mrb[0].mxu0
        %v1329 = vpop.f32.mrb[0].mxu0
        %v1330 = vpop.f32.mrb[0].mxu0
        %1331 = vdwg.mxu0
        %v1333 = vsel %vm1193, %v1188, 0
        %v1336 = vsel %vm1193, %v1192, 0
        %1338 = vmatprep.subr.bf16.mxu0 0
        %1339 = vmatpush1.bf16.xpose.msra.mxu0 %v1336
        %1340 = vmatprep.subr.bf16.mxu0 0
        %1341 = vmatpush1.bf16.xpose.msra.mxu0 0
        %1342 = vmatprep.subr.bf16.mxu0 0
        %1343 = vmatpush1.bf16.xpose.msra.mxu0 0
        %1344 = vmatprep.subr.bf16.mxu0 0
        %1345 = vmatpush1.bf16.xpose.msra.mxu0 0
        %1346 = vmatprep.subr.bf16.mxu0 0
        %1347 = vmatpush1.bf16.xpose.msra.mxu0 0
        %1348 = vmatprep.subr.bf16.mxu0 0
        %1349 = vmatpush1.bf16.xpose.msra.mxu0 0
        %1350 = vmatprep.subr.bf16.mxu0 0
        %1351 = vmatpush1.bf16.xpose.msra.mxu0 0
        %1352 = vmatprep.subr.bf16.mxu0 0
        %1353 = vmatpush1.bf16.xpose.msra.mxu0 0
        %1354 = vmatprep.subr.bf16.mxu0 0
        %1355 = vmatpush1.bf16.xpose.msra.mxu0 0
        %1356 = vmatprep.subr.bf16.mxu0 0
        %1357 = vmatpush1.bf16.xpose.msra.mxu0 0
        %1358 = vmatprep.subr.bf16.mxu0 0
        %1359 = vmatpush1.bf16.xpose.msra.mxu0 0
        %1360 = vmatprep.subr.bf16.mxu0 0
        %1361 = vmatpush1.bf16.xpose.msra.mxu0 0
        %1362 = vmatprep.subr.bf16.mxu0 0
        %1363 = vmatpush1.bf16.xpose.msra.mxu0 0
        %1364 = vmatprep.subr.bf16.mxu0 0
        %1365 = vmatpush1.bf16.xpose.msra.mxu0 0
        %1366 = vmatprep.subr.bf16.mxu0 0
        %1367 = vmatpush1.bf16.xpose.msra.mxu0 0
        %1368 = vmatprep.subr.bf16.mxu0 0
        %1369 = vmatpush1.bf16.xpose.msra.mxu0 0
        %1370 = vmatprep.mubr.bf16.mxu0 0
        %1371 = vmatmul.mubr.bf16.gmra.mrb[0].mxu0 %v1333
        %v1372 = vpop.f32.mrb[0].mxu0
        %v1373 = vadd.f32 0.0, %v1372
        %v1374 = vpop.f32.mrb[0].mxu0
        %v1375 = vpop.f32.mrb[0].mxu0
        %v1376 = vpop.f32.mrb[0].mxu0
        %1377 = vdwg.mxu0
        %v1378 = vsel %vm1193, %v1235, -inf
        %1379 = vmax.xlane.f32.xlu0 %v1378
        %v1380 = vpop.xlane.xlu0 %1379
        %v1381 = vsel %vm1193, %v1281, -inf
        %1382 = vmax.xlane.f32.xlu0 %v1381
        %v1383 = vpop.xlane.xlu0 %1382
        %v1384 = vsel %vm1193, %v1327, -inf
        %1385 = vmax.xlane.f32.xlu0 %v1384
        %v1386 = vpop.xlane.xlu0 %1385
        %v1387 = vsel %vm1193, %v1373, -inf
        %1388 = vmax.xlane.f32.xlu0 %v1387
        %v1389 = vpop.xlane.xlu0 %1388
        %v1390 = vsub.f32 %v1235, %v1380
        %v1391 = vsub.f32 %v1281, %v1383
        %v1392 = vsub.f32 %v1327, %v1386
        %v1393 = vsub.f32 %v1373, %v1389
        %v1394 = vmul.f32 %v1390, 1.442695
        %v1395 = vpow.pop %v1394
        %v1396 = vmul.f32 %v1391, 1.442695
        %v1397 = vpow.pop %v1396
        %v1398 = vmul.f32 %v1392, 1.442695
        %v1399 = vpow.pop %v1398
        %v1400 = vmul.f32 %v1393, 1.442695
        %v1401 = vpow.pop %v1400
        %v1402 = vsel %vm1193, %v1395, 0.0
        %1403 = vadd.xlane.f32.xlu0 %v1402
        %v1404 = vpop.xlane.xlu0 %1403
        %v1405 = vsel %vm1193, %v1397, 0.0
        %1406 = vadd.xlane.f32.xlu0 %v1405
        %v1407 = vpop.xlane.xlu0 %1406
        %v1408 = vsel %vm1193, %v1399, 0.0
        %1409 = vadd.xlane.f32.xlu0 %v1408
        %v1410 = vpop.xlane.xlu0 %1409
        %v1411 = vsel %vm1193, %v1401, 0.0
        %1412 = vadd.xlane.f32.xlu0 %v1411
        %v1413 = vpop.xlane.xlu0 %1412
        %v1414 = vrcp.pop %v1404
        %v1415 = vrcp.pop %v1407
        %v1416 = vrcp.pop %v1410
        %v1417 = vrcp.pop %v1413
        %v1418 = vmul.f32 %v1395, %v1414
        %v1419 = vmul.f32 %v1397, %v1415
        %v1420 = vmul.f32 %v1399, %v1416
        %v1421 = vmul.f32 %v1401, %v1417
        %v1422 = vpack.c.bf16 %v1418, %v1418
        %v1423 = vpack.c.bf16 %v1419, %v1419
        %v1424 = vpack.c.bf16 %v1420, %v1420
        %v1425 = vpack.c.bf16 %v1421, %v1421
        %v1426 = vld [vmem:[#allocation3] sm:$0xf]
        %v1427 = vld [vmem:[#allocation3 + $0x4] sm:$0xf]
        %v1428 = vld [vmem:[#allocation3 + $0x8] sm:$0xf]
        %v1429 = vld [vmem:[#allocation3 + $0xc] sm:$0xf]
        %v1431 = vsel %vm1193, %v1422, 0
        %vm1433 = vcmask 1043456
        %v1435 = vsel %vm1433, %v1426, 0
        %1437 = vmatprep.subr.bf16.mxu0 0
        %1438 = vmatpush1.bf16.msra.mxu0 %v1435
        %1439 = vmatprep.subr.bf16.mxu0 0
        %1440 = vmatpush1.bf16.msra.mxu0 0
        %1441 = vmatprep.subr.bf16.mxu0 0
        %1442 = vmatpush1.bf16.msra.mxu0 0
        %1443 = vmatprep.subr.bf16.mxu0 0
        %1444 = vmatpush1.bf16.msra.mxu0 0
        %1445 = vmatprep.subr.bf16.mxu0 0
        %1446 = vmatpush1.bf16.msra.mxu0 0
        %1447 = vmatprep.subr.bf16.mxu0 0
        %1448 = vmatpush1.bf16.msra.mxu0 0
        %1449 = vmatprep.subr.bf16.mxu0 0
        %1450 = vmatpush1.bf16.msra.mxu0 0
        %1451 = vmatprep.subr.bf16.mxu0 0
        %1452 = vmatpush1.bf16.msra.mxu0 0
        %1453 = vmatprep.subr.bf16.mxu0 0
        %1454 = vmatpush1.bf16.msra.mxu0 0
        %1455 = vmatprep.subr.bf16.mxu0 0
        %1456 = vmatpush1.bf16.msra.mxu0 0
        %1457 = vmatprep.subr.bf16.mxu0 0
        %1458 = vmatpush1.bf16.msra.mxu0 0
        %1459 = vmatprep.subr.bf16.mxu0 0
        %1460 = vmatpush1.bf16.msra.mxu0 0
        %1461 = vmatprep.subr.bf16.mxu0 0
        %1462 = vmatpush1.bf16.msra.mxu0 0
        %1463 = vmatprep.subr.bf16.mxu0 0
        %1464 = vmatpush1.bf16.msra.mxu0 0
        %1465 = vmatprep.subr.bf16.mxu0 0
        %1466 = vmatpush1.bf16.msra.mxu0 0
        %1467 = vmatprep.subr.bf16.mxu0 0
        %1468 = vmatpush1.bf16.msra.mxu0 0
        %1469 = vmatprep.mubr.bf16.mxu0 0
        %1470 = vmatmul.mubr.bf16.gmra.mrb[0].mxu0 %v1431
        %v1471 = vpop.f32.mrb[0].mxu0
        %v1472 = vadd.f32 0.0, %v1471
        %v1473 = vpop.f32.mrb[0].mxu0
        %v1474 = vpop.f32.mrb[0].mxu0
        %v1475 = vpop.f32.mrb[0].mxu0
        %1476 = vdwg.mxu0
        %v1478 = vsel %vm1193, %v1423, 0
        %v1481 = vsel %vm1433, %v1427, 0
        %1483 = vmatprep.subr.bf16.mxu0 0
        %1484 = vmatpush1.bf16.msra.mxu0 %v1481
        %1485 = vmatprep.subr.bf16.mxu0 0
        %1486 = vmatpush1.bf16.msra.mxu0 0
        %1487 = vmatprep.subr.bf16.mxu0 0
        %1488 = vmatpush1.bf16.msra.mxu0 0
        %1489 = vmatprep.subr.bf16.mxu0 0
        %1490 = vmatpush1.bf16.msra.mxu0 0
        %1491 = vmatprep.subr.bf16.mxu0 0
        %1492 = vmatpush1.bf16.msra.mxu0 0
        %1493 = vmatprep.subr.bf16.mxu0 0
        %1494 = vmatpush1.bf16.msra.mxu0 0
        %1495 = vmatprep.subr.bf16.mxu0 0
        %1496 = vmatpush1.bf16.msra.mxu0 0
        %1497 = vmatprep.subr.bf16.mxu0 0
        %1498 = vmatpush1.bf16.msra.mxu0 0
        %1499 = vmatprep.subr.bf16.mxu0 0
        %1500 = vmatpush1.bf16.msra.mxu0 0
        %1501 = vmatprep.subr.bf16.mxu0 0
        %1502 = vmatpush1.bf16.msra.mxu0 0
        %1503 = vmatprep.subr.bf16.mxu0 0
        %1504 = vmatpush1.bf16.msra.mxu0 0
        %1505 = vmatprep.subr.bf16.mxu0 0
        %1506 = vmatpush1.bf16.msra.mxu0 0
        %1507 = vmatprep.subr.bf16.mxu0 0
        %1508 = vmatpush1.bf16.msra.mxu0 0
        %1509 = vmatprep.subr.bf16.mxu0 0
        %1510 = vmatpush1.bf16.msra.mxu0 0
        %1511 = vmatprep.subr.bf16.mxu0 0
        %1512 = vmatpush1.bf16.msra.mxu0 0
        %1513 = vmatprep.subr.bf16.mxu0 0
        %1514 = vmatpush1.bf16.msra.mxu0 0
        %1515 = vmatprep.mubr.bf16.mxu0 0
        %1516 = vmatmul.mubr.bf16.gmra.mrb[0].mxu0 %v1478
        %v1517 = vpop.f32.mrb[0].mxu0
        %v1518 = vadd.f32 0.0, %v1517
        %v1519 = vpop.f32.mrb[0].mxu0
        %v1520 = vpop.f32.mrb[0].mxu0
        %v1521 = vpop.f32.mrb[0].mxu0
        %1522 = vdwg.mxu0
        %v1524 = vsel %vm1193, %v1424, 0
        %v1527 = vsel %vm1433, %v1428, 0
        %1529 = vmatprep.subr.bf16.mxu0 0
        %1530 = vmatpush1.bf16.msra.mxu0 %v1527
        %1531 = vmatprep.subr.bf16.mxu0 0
        %1532 = vmatpush1.bf16.msra.mxu0 0
        %1533 = vmatprep.subr.bf16.mxu0 0
        %1534 = vmatpush1.bf16.msra.mxu0 0
        %1535 = vmatprep.subr.bf16.mxu0 0
        %1536 = vmatpush1.bf16.msra.mxu0 0
        %1537 = vmatprep.subr.bf16.mxu0 0
        %1538 = vmatpush1.bf16.msra.mxu0 0
        %1539 = vmatprep.subr.bf16.mxu0 0
        %1540 = vmatpush1.bf16.msra.mxu0 0
        %1541 = vmatprep.subr.bf16.mxu0 0
        %1542 = vmatpush1.bf16.msra.mxu0 0
        %1543 = vmatprep.subr.bf16.mxu0 0
        %1544 = vmatpush1.bf16.msra.mxu0 0
        %1545 = vmatprep.subr.bf16.mxu0 0
        %1546 = vmatpush1.bf16.msra.mxu0 0
        %1547 = vmatprep.subr.bf16.mxu0 0
        %1548 = vmatpush1.bf16.msra.mxu0 0
        %1549 = vmatprep.subr.bf16.mxu0 0
        %1550 = vmatpush1.bf16.msra.mxu0 0
        %1551 = vmatprep.subr.bf16.mxu0 0
        %1552 = vmatpush1.bf16.msra.mxu0 0
        %1553 = vmatprep.subr.bf16.mxu0 0
        %1554 = vmatpush1.bf16.msra.mxu0 0
        %1555 = vmatprep.subr.bf16.mxu0 0
        %1556 = vmatpush1.bf16.msra.mxu0 0
        %1557 = vmatprep.subr.bf16.mxu0 0
        %1558 = vmatpush1.bf16.msra.mxu0 0
        %1559 = vmatprep.subr.bf16.mxu0 0
        %1560 = vmatpush1.bf16.msra.mxu0 0
        %1561 = vmatprep.mubr.bf16.mxu0 0
        %1562 = vmatmul.mubr.bf16.gmra.mrb[0].mxu0 %v1524
        %v1563 = vpop.f32.mrb[0].mxu0
        %v1564 = vadd.f32 0.0, %v1563
        %v1565 = vpop.f32.mrb[0].mxu0
        %v1566 = vpop.f32.mrb[0].mxu0
        %v1567 = vpop.f32.mrb[0].mxu0
        %1568 = vdwg.mxu0
        %v1570 = vsel %vm1193, %v1425, 0
        %v1573 = vsel %vm1433, %v1429, 0
        %1575 = vmatprep.subr.bf16.mxu0 0
        %1576 = vmatpush1.bf16.msra.mxu0 %v1573
        %1577 = vmatprep.subr.bf16.mxu0 0
        %1578 = vmatpush1.bf16.msra.mxu0 0
        %1579 = vmatprep.subr.bf16.mxu0 0
        %1580 = vmatpush1.bf16.msra.mxu0 0
        %1581 = vmatprep.subr.bf16.mxu0 0
        %1582 = vmatpush1.bf16.msra.mxu0 0
        %1583 = vmatprep.subr.bf16.mxu0 0
        %1584 = vmatpush1.bf16.msra.mxu0 0
        %1585 = vmatprep.subr.bf16.mxu0 0
        %1586 = vmatpush1.bf16.msra.mxu0 0
        %1587 = vmatprep.subr.bf16.mxu0 0
        %1588 = vmatpush1.bf16.msra.mxu0 0
        %1589 = vmatprep.subr.bf16.mxu0 0
        %1590 = vmatpush1.bf16.msra.mxu0 0
        %1591 = vmatprep.subr.bf16.mxu0 0
        %1592 = vmatpush1.bf16.msra.mxu0 0
        %1593 = vmatprep.subr.bf16.mxu0 0
        %1594 = vmatpush1.bf16.msra.mxu0 0
        %1595 = vmatprep.subr.bf16.mxu0 0
        %1596 = vmatpush1.bf16.msra.mxu0 0
        %1597 = vmatprep.subr.bf16.mxu0 0
        %1598 = vmatpush1.bf16.msra.mxu0 0
        %1599 = vmatprep.subr.bf16.mxu0 0
        %1600 = vmatpush1.bf16.msra.mxu0 0
        %1601 = vmatprep.subr.bf16.mxu0 0
        %1602 = vmatpush1.bf16.msra.mxu0 0
        %1603 = vmatprep.subr.bf16.mxu0 0
        %1604 = vmatpush1.bf16.msra.mxu0 0
        %1605 = vmatprep.subr.bf16.mxu0 0
        %1606 = vmatpush1.bf16.msra.mxu0 0
        %1607 = vmatprep.mubr.bf16.mxu0 0
        %1608 = vmatmul.mubr.bf16.gmra.mrb[0].mxu0 %v1570
        %v1609 = vpop.f32.mrb[0].mxu0
        %v1610 = vadd.f32 0.0, %v1609
        %v1611 = vpop.f32.mrb[0].mxu0
        %v1612 = vpop.f32.mrb[0].mxu0
        %v1613 = vpop.f32.mrb[0].mxu0
        %1614 = vdwg.mxu0
        %v1615 = vpack.c.bf16 %v1472, %v1472
        %v1616 = vpack.c.bf16 %v1518, %v1518
        %v1617 = vpack.c.bf16 %v1564, %v1564
        %v1618 = vpack.c.bf16 %v1610, %v1610
        %v1619 = vld [vmem:[%s4] sm:$0xf]
        %v1620 = vld [vmem:[%s4 + $0x4] sm:$0xf]
        %v1621 = vld [vmem:[%s4 + $0x8] sm:$0xf]
        %v1622 = vld [vmem:[%s4 + $0xc] sm:$0xf]
        %v1624 = vsel %vm1193, %v1615, 0
        %v1627 = vsel %vm1433, %v1619, 0
        %1629 = vmatprep.subr.bf16.mxu0 0
        %1630 = vmatpush1.bf16.msra.mxu0 %v1627
        %1631 = vmatprep.subr.bf16.mxu0 0
        %1632 = vmatpush1.bf16.msra.mxu0 0
        %1633 = vmatprep.subr.bf16.mxu0 0
        %1634 = vmatpush1.bf16.msra.mxu0 0
        %1635 = vmatprep.subr.bf16.mxu0 0
        %1636 = vmatpush1.bf16.msra.mxu0 0
        %1637 = vmatprep.subr.bf16.mxu0 0
        %1638 = vmatpush1.bf16.msra.mxu0 0
        %1639 = vmatprep.subr.bf16.mxu0 0
        %1640 = vmatpush1.bf16.msra.mxu0 0
        %1641 = vmatprep.subr.bf16.mxu0 0
        %1642 = vmatpush1.bf16.msra.mxu0 0
        %1643 = vmatprep.subr.bf16.mxu0 0
        %1644 = vmatpush1.bf16.msra.mxu0 0
        %1645 = vmatprep.subr.bf16.mxu0 0
        %1646 = vmatpush1.bf16.msra.mxu0 0
        %1647 = vmatprep.subr.bf16.mxu0 0
        %1648 = vmatpush1.bf16.msra.mxu0 0
        %1649 = vmatprep.subr.bf16.mxu0 0
        %1650 = vmatpush1.bf16.msra.mxu0 0
        %1651 = vmatprep.subr.bf16.mxu0 0
        %1652 = vmatpush1.bf16.msra.mxu0 0
        %1653 = vmatprep.subr.bf16.mxu0 0
        %1654 = vmatpush1.bf16.msra.mxu0 0
        %1655 = vmatprep.subr.bf16.mxu0 0
        %1656 = vmatpush1.bf16.msra.mxu0 0
        %1657 = vmatprep.subr.bf16.mxu0 0
        %1658 = vmatpush1.bf16.msra.mxu0 0
        %1659 = vmatprep.subr.bf16.mxu0 0
        %1660 = vmatpush1.bf16.msra.mxu0 0
        %1661 = vmatprep.mubr.bf16.mxu0 0
        %1662 = vmatmul.mubr.bf16.gmra.mrb[0].mxu0 %v1624
        %v1663 = vpop.f32.mrb[0].mxu0
        %v1664 = vadd.f32 0.0, %v1663
        %v1665 = vpop.f32.mrb[0].mxu0
        %v1666 = vpop.f32.mrb[0].mxu0
        %v1667 = vpop.f32.mrb[0].mxu0
        %1668 = vdwg.mxu0
        %v1670 = vsel %vm1193, %v1616, 0
        %v1673 = vsel %vm1433, %v1620, 0
        %1675 = vmatprep.subr.bf16.mxu0 0
        %1676 = vmatpush1.bf16.msra.mxu0 %v1673
        %1677 = vmatprep.subr.bf16.mxu0 0
        %1678 = vmatpush1.bf16.msra.mxu0 0
        %1679 = vmatprep.subr.bf16.mxu0 0
        %1680 = vmatpush1.bf16.msra.mxu0 0
        %1681 = vmatprep.subr.bf16.mxu0 0
        %1682 = vmatpush1.bf16.msra.mxu0 0
        %1683 = vmatprep.subr.bf16.mxu0 0
        %1684 = vmatpush1.bf16.msra.mxu0 0
        %1685 = vmatprep.subr.bf16.mxu0 0
        %1686 = vmatpush1.bf16.msra.mxu0 0
        %1687 = vmatprep.subr.bf16.mxu0 0
        %1688 = vmatpush1.bf16.msra.mxu0 0
        %1689 = vmatprep.subr.bf16.mxu0 0
        %1690 = vmatpush1.bf16.msra.mxu0 0
        %1691 = vmatprep.subr.bf16.mxu0 0
        %1692 = vmatpush1.bf16.msra.mxu0 0
        %1693 = vmatprep.subr.bf16.mxu0 0
        %1694 = vmatpush1.bf16.msra.mxu0 0
        %1695 = vmatprep.subr.bf16.mxu0 0
        %1696 = vmatpush1.bf16.msra.mxu0 0
        %1697 = vmatprep.subr.bf16.mxu0 0
        %1698 = vmatpush1.bf16.msra.mxu0 0
        %1699 = vmatprep.subr.bf16.mxu0 0
        %1700 = vmatpush1.bf16.msra.mxu0 0
        %1701 = vmatprep.subr.bf16.mxu0 0
        %1702 = vmatpush1.bf16.msra.mxu0 0
        %1703 = vmatprep.subr.bf16.mxu0 0
        %1704 = vmatpush1.bf16.msra.mxu0 0
        %1705 = vmatprep.subr.bf16.mxu0 0
        %1706 = vmatpush1.bf16.msra.mxu0 0
        %1707 = vmatprep.mubr.bf16.mxu0 0
        %1708 = vmatmul.mubr.bf16.gmra.mrb[0].mxu0 %v1670
        %v1709 = vpop.f32.mrb[0].mxu0
        %v1710 = vadd.f32 0.0, %v1709
        %v1711 = vpop.f32.mrb[0].mxu0
        %v1712 = vpop.f32.mrb[0].mxu0
        %v1713 = vpop.f32.mrb[0].mxu0
        %1714 = vdwg.mxu0
        %v1716 = vsel %vm1193, %v1617, 0
        %v1719 = vsel %vm1433, %v1621, 0
        %1721 = vmatprep.subr.bf16.mxu0 0
        %1722 = vmatpush1.bf16.msra.mxu0 %v1719
        %1723 = vmatprep.subr.bf16.mxu0 0
        %1724 = vmatpush1.bf16.msra.mxu0 0
        %1725 = vmatprep.subr.bf16.mxu0 0
        %1726 = vmatpush1.bf16.msra.mxu0 0
        %1727 = vmatprep.subr.bf16.mxu0 0
        %1728 = vmatpush1.bf16.msra.mxu0 0
        %1729 = vmatprep.subr.bf16.mxu0 0
        %1730 = vmatpush1.bf16.msra.mxu0 0
        %1731 = vmatprep.subr.bf16.mxu0 0
        %1732 = vmatpush1.bf16.msra.mxu0 0
        %1733 = vmatprep.subr.bf16.mxu0 0
        %1734 = vmatpush1.bf16.msra.mxu0 0
        %1735 = vmatprep.subr.bf16.mxu0 0
        %1736 = vmatpush1.bf16.msra.mxu0 0
        %1737 = vmatprep.subr.bf16.mxu0 0
        %1738 = vmatpush1.bf16.msra.mxu0 0
        %1739 = vmatprep.subr.bf16.mxu0 0
        %1740 = vmatpush1.bf16.msra.mxu0 0
        %1741 = vmatprep.subr.bf16.mxu0 0
        %1742 = vmatpush1.bf16.msra.mxu0 0
        %1743 = vmatprep.subr.bf16.mxu0 0
        %1744 = vmatpush1.bf16.msra.mxu0 0
        %1745 = vmatprep.subr.bf16.mxu0 0
        %1746 = vmatpush1.bf16.msra.mxu0 0
        %1747 = vmatprep.subr.bf16.mxu0 0
        %1748 = vmatpush1.bf16.msra.mxu0 0
        %1749 = vmatprep.subr.bf16.mxu0 0
        %1750 = vmatpush1.bf16.msra.mxu0 0
        %1751 = vmatprep.subr.bf16.mxu0 0
        %1752 = vmatpush1.bf16.msra.mxu0 0
        %1753 = vmatprep.mubr.bf16.mxu0 0
        %1754 = vmatmul.mubr.bf16.gmra.mrb[0].mxu0 %v1716
        %v1755 = vpop.f32.mrb[0].mxu0
        %v1756 = vadd.f32 0.0, %v1755
        %v1757 = vpop.f32.mrb[0].mxu0
        %v1758 = vpop.f32.mrb[0].mxu0
        %v1759 = vpop.f32.mrb[0].mxu0
        %1760 = vdwg.mxu0
        %v1762 = vsel %vm1193, %v1618, 0
        %v1765 = vsel %vm1433, %v1622, 0
        %1767 = vmatprep.subr.bf16.mxu0 0
        %1768 = vmatpush1.bf16.msra.mxu0 %v1765
        %1769 = vmatprep.subr.bf16.mxu0 0
        %1770 = vmatpush1.bf16.msra.mxu0 0
        %1771 = vmatprep.subr.bf16.mxu0 0
        %1772 = vmatpush1.bf16.msra.mxu0 0
        %1773 = vmatprep.subr.bf16.mxu0 0
        %1774 = vmatpush1.bf16.msra.mxu0 0
        %1775 = vmatprep.subr.bf16.mxu0 0
        %1776 = vmatpush1.bf16.msra.mxu0 0
        %1777 = vmatprep.subr.bf16.mxu0 0
        %1778 = vmatpush1.bf16.msra.mxu0 0
        %1779 = vmatprep.subr.bf16.mxu0 0
        %1780 = vmatpush1.bf16.msra.mxu0 0
        %1781 = vmatprep.subr.bf16.mxu0 0
        %1782 = vmatpush1.bf16.msra.mxu0 0
        %1783 = vmatprep.subr.bf16.mxu0 0
        %1784 = vmatpush1.bf16.msra.mxu0 0
        %1785 = vmatprep.subr.bf16.mxu0 0
        %1786 = vmatpush1.bf16.msra.mxu0 0
        %1787 = vmatprep.subr.bf16.mxu0 0
        %1788 = vmatpush1.bf16.msra.mxu0 0
        %1789 = vmatprep.subr.bf16.mxu0 0
        %1790 = vmatpush1.bf16.msra.mxu0 0
        %1791 = vmatprep.subr.bf16.mxu0 0
        %1792 = vmatpush1.bf16.msra.mxu0 0
        %1793 = vmatprep.subr.bf16.mxu0 0
        %1794 = vmatpush1.bf16.msra.mxu0 0
        %1795 = vmatprep.subr.bf16.mxu0 0
        %1796 = vmatpush1.bf16.msra.mxu0 0
        %1797 = vmatprep.subr.bf16.mxu0 0
        %1798 = vmatpush1.bf16.msra.mxu0 0
        %1799 = vmatprep.mubr.bf16.mxu0 0
        %1800 = vmatmul.mubr.bf16.gmra.mrb[0].mxu0 %v1762
        %v1801 = vpop.f32.mrb[0].mxu0
        %v1802 = vadd.f32 0.0, %v1801
        %v1803 = vpop.f32.mrb[0].mxu0
        %v1804 = vpop.f32.mrb[0].mxu0
        %v1805 = vpop.f32.mrb[0].mxu0
        %1806 = vdwg.mxu0
        %v1807 = vsel %vm985, %v1664, 0.0
        %v1808 = vsel %vm985, %v1710, 0.0
        %v1809 = vadd.f32 %v1807, %v1808
        %v1810 = vsel %vm985, %v1756, 0.0
        %v1811 = vadd.f32 %v1809, %v1810
        %v1812 = vsel %vm985, %v1802, 0.0
        %v1813 = vadd.f32 %v1811, %v1812
        %v1814 = vld [vmem:[%s5] sm:$0x1]
        %v1816 = vlaneseq
        %v1817 = vshrl.u32 %v1816, 7
        %v1818 = vsub.s32 0, %v1817
        %v1819 = vrot.slane %v1814, %v1818
        %v1821 = vadd.f32 %v1813, %v1819
        %v1822 = vadd.f32 %v955, %v1821
        %v1823 = vld [vmem:[%s6] sm:$0x1]
        %v1824 = vld [vmem:[%s7] sm:$0x1]
        %v1825 = vsel %vm985, %v1822, 0.0
        %1826 = vadd.xlane.f32.xlu0 %v1825
        %v1827 = vpop.xlane.xlu0 %1826
        %v1828 = vmul.f32 %v1827, 0.03125
        %v1829 = vmul.f32 %v1822, %v1822
        %v1830 = vsel %vm985, %v1829, 0.0
        %1831 = vadd.xlane.f32.xlu0 %v1830
        %v1832 = vpop.xlane.xlu0 %1831
        %v1833 = vmul.f32 %v1832, 0.03125
        %v1834 = vmul.f32 %v1828, %v1828
        %v1835 = vsub.f32 %v1833, %v1834
        %v1836 = vadd.f32 %v1835, 1e-05
        %v1837 = vrsqrt.pop %v1836
        %v1838 = vsub.f32 %v1822, %v1828
        %v1839 = vmul.f32 %v1838, %v1837
        %v1841 = vlaneseq
        %v1842 = vshrl.u32 %v1841, 7
        %v1843 = vsub.s32 0, %v1842
        %v1844 = vrot.slane %v1823, %v1843
        %v1846 = vmul.f32 %v1839, %v1844
        %v1848 = vlaneseq
        %v1849 = vshrl.u32 %v1848, 7
        %v1850 = vsub.s32 0, %v1849
        %v1851 = vrot.slane %v1824, %v1850
        %v1853 = vadd.f32 %v1846, %v1851
        %v1854 = vpack.c.bf16 %v1853, %v1853
        %v1855 = vld [vmem:[%s8] sm:$0xf]
        %v1856 = vld [vmem:[%s8 + $0x4] sm:$0xf]
        %v1857 = vld [vmem:[%s8 + $0x8] sm:$0xf]
        %v1858 = vld [vmem:[%s8 + $0xc] sm:$0xf]
        %v1859 = vld [vmem:[%s9] sm:$0x1]
        %v1861 = vlaneseq
        %v1862 = vshrl.u32 %v1861, 7
        %v1863 = vsub.s32 0, %v1862
        %v1864 = vrot.slane %v1859, %v1863
        %v1870 = vunpack.c.l.b16 %v1855
        %v1871 = vunpack.c.l.b16 %v1856
        %v1872 = vunpack.c.l.b16 %v1857
        %v1873 = vunpack.c.l.b16 %v1858
        %v1874 = vpack.c.b16 %v1871, %v1870
        %v1875 = vpack.c.b16 %v1873, %v1872
        %v1879 = vsel %vm985, %v1854, 0
        %1881 = vmatprep.subr.bf16.mxu0 0
        %1882 = vmatpush1.bf16.msra.mxu0 %v1874
        %1883 = vmatprep.subr.bf16.mxu0 0
        %1884 = vmatpush1.bf16.msra.mxu0 %v1875
        %1885 = vmatprep.subr.bf16.mxu0 0
        %1886 = vmatpush1.bf16.msra.mxu0 0
        %1887 = vmatprep.subr.bf16.mxu0 0
        %1888 = vmatpush1.bf16.msra.mxu0 0
        %1889 = vmatprep.subr.bf16.mxu0 0
        %1890 = vmatpush1.bf16.msra.mxu0 0
        %1891 = vmatprep.subr.bf16.mxu0 0
        %1892 = vmatpush1.bf16.msra.mxu0 0
        %1893 = vmatprep.subr.bf16.mxu0 0
        %1894 = vmatpush1.bf16.msra.mxu0 0
        %1895 = vmatprep.subr.bf16.mxu0 0
        %1896 = vmatpush1.bf16.msra.mxu0 0
        %1897 = vmatprep.subr.bf16.mxu0 0
        %1898 = vmatpush1.bf16.msra.mxu0 0
        %1899 = vmatprep.subr.bf16.mxu0 0
        %1900 = vmatpush1.bf16.msra.mxu0 0
        %1901 = vmatprep.subr.bf16.mxu0 0
        %1902 = vmatpush1.bf16.msra.mxu0 0
        %1903 = vmatprep.subr.bf16.mxu0 0
        %1904 = vmatpush1.bf16.msra.mxu0 0
        %1905 = vmatprep.subr.bf16.mxu0 0
        %1906 = vmatpush1.bf16.msra.mxu0 0
        %1907 = vmatprep.subr.bf16.mxu0 0
        %1908 = vmatpush1.bf16.msra.mxu0 0
        %1909 = vmatprep.subr.bf16.mxu0 0
        %1910 = vmatpush1.bf16.msra.mxu0 0
        %1911 = vmatprep.subr.bf16.mxu0 0
        %1912 = vmatpush1.bf16.msra.mxu0 0
        %1913 = vmatprep.mubr.bf16.mxu0 0
        %1914 = vmatmul.mubr.bf16.gmra.mrb[0].mxu0 %v1879
        %v1915 = vpop.f32.mrb[0].mxu0
        %v1916 = vadd.f32 %v1864, %v1915
        %v1917 = vpop.f32.mrb[0].mxu0
        %v1918 = vpop.f32.mrb[0].mxu0
        %v1919 = vpop.f32.mrb[0].mxu0
        %1920 = vdwg.mxu0
        %v1921 = vmax.f32 %v1916, 0.0
        %v1922 = vpack.c.bf16 %v1921, %v1921
        %v1923 = vld [vmem:[%s10] sm:$0xf]
        %v1924 = vld [vmem:[%s10 + $0x4] sm:$0xf]
        %v1925 = vld [vmem:[%s10 + $0x8] sm:$0xf]
        %v1926 = vld [vmem:[%s10 + $0xc] sm:$0xf]
        %v1927 = vld [vmem:[%s10 + $0x10] sm:$0xf]
        %v1928 = vld [vmem:[%s10 + $0x14] sm:$0xf]
        %v1929 = vld [vmem:[%s10 + $0x18] sm:$0xf]
        %v1930 = vld [vmem:[%s10 + $0x1c] sm:$0xf]
        %v1931 = vld [vmem:[%s11] sm:$0x1]
        %v1933 = vlaneseq
        %v1934 = vshrl.u32 %v1933, 7
        %v1935 = vsub.s32 0, %v1934
        %v1936 = vrot.slane %v1931, %v1935
        %v1946 = vunpack.c.l.b16 %v1923
        %v1947 = vunpack.c.l.b16 %v1924
        %v1948 = vunpack.c.l.b16 %v1925
        %v1949 = vunpack.c.l.b16 %v1926
        %v1950 = vunpack.c.l.b16 %v1927
        %v1951 = vunpack.c.l.b16 %v1928
        %v1952 = vunpack.c.l.b16 %v1929
        %v1953 = vunpack.c.l.b16 %v1930
        %v1954 = vpack.c.b16 %v1947, %v1946
        %v1955 = vpack.c.b16 %v1949, %v1948
        %v1956 = vpack.c.b16 %v1951, %v1950
        %v1957 = vpack.c.b16 %v1953, %v1952
        %vm1962 = vcmask 523264
        %v1964 = vsel %vm1962, %v1922, 0
        %1966 = vmatprep.subr.bf16.mxu0 0
        %1967 = vmatpush1.bf16.msra.mxu0 %v1954
        %1968 = vmatprep.subr.bf16.mxu0 0
        %1969 = vmatpush1.bf16.msra.mxu0 %v1955
        %1970 = vmatprep.subr.bf16.mxu0 0
        %1971 = vmatpush1.bf16.msra.mxu0 %v1956
        %1972 = vmatprep.subr.bf16.mxu0 0
        %1973 = vmatpush1.bf16.msra.mxu0 %v1957
        %1974 = vmatprep.subr.bf16.mxu0 0
        %1975 = vmatpush1.bf16.msra.mxu0 0
        %1976 = vmatprep.subr.bf16.mxu0 0
        %1977 = vmatpush1.bf16.msra.mxu0 0
        %1978 = vmatprep.subr.bf16.mxu0 0
        %1979 = vmatpush1.bf16.msra.mxu0 0
        %1980 = vmatprep.subr.bf16.mxu0 0
        %1981 = vmatpush1.bf16.msra.mxu0 0
        %1982 = vmatprep.subr.bf16.mxu0 0
        %1983 = vmatpush1.bf16.msra.mxu0 0
        %1984 = vmatprep.subr.bf16.mxu0 0
        %1985 = vmatpush1.bf16.msra.mxu0 0
        %1986 = vmatprep.subr.bf16.mxu0 0
        %1987 = vmatpush1.bf16.msra.mxu0 0
        %1988 = vmatprep.subr.bf16.mxu0 0
        %1989 = vmatpush1.bf16.msra.mxu0 0
        %1990 = vmatprep.subr.bf16.mxu0 0
        %1991 = vmatpush1.bf16.msra.mxu0 0
        %1992 = vmatprep.subr.bf16.mxu0 0
        %1993 = vmatpush1.bf16.msra.mxu0 0
        %1994 = vmatprep.subr.bf16.mxu0 0
        %1995 = vmatpush1.bf16.msra.mxu0 0
        %1996 = vmatprep.subr.bf16.mxu0 0
        %1997 = vmatpush1.bf16.msra.mxu0 0
        %1998 = vmatprep.mubr.bf16.mxu0 0
        %1999 = vmatmul.mubr.bf16.gmra.mrb[0].mxu0 %v1964
        %v2000 = vpop.f32.mrb[0].mxu0
        %v2001 = vadd.f32 %v1936, %v2000
        %v2002 = vpop.f32.mrb[0].mxu0
        %v2003 = vpop.f32.mrb[0].mxu0
        %v2004 = vpop.f32.mrb[0].mxu0
        %2005 = vdwg.mxu0
        %v2006 = vadd.f32 %v1853, %v2001
        %v2007 = vld [vmem:[%s12] sm:$0x1]
        %v2008 = vld [vmem:[%s13] sm:$0x1]
        %v2009 = vsel %vm985, %v2006, 0.0
        %2010 = vadd.xlane.f32.xlu0 %v2009
        %v2011 = vpop.xlane.xlu0 %2010
        %v2012 = vmul.f32 %v2011, 0.03125
        %v2013 = vmul.f32 %v2006, %v2006
        %v2014 = vsel %vm985, %v2013, 0.0
        %2015 = vadd.xlane.f32.xlu0 %v2014
        %v2016 = vpop.xlane.xlu0 %2015
        %v2017 = vmul.f32 %v2016, 0.03125
        %v2018 = vmul.f32 %v2012, %v2012
        %v2019 = vsub.f32 %v2017, %v2018
        %v2020 = vadd.f32 %v2019, 1e-05
        %v2021 = vrsqrt.pop %v2020
        %v2022 = vsub.f32 %v2006, %v2012
        %v2023 = vmul.f32 %v2022, %v2021
        %v2025 = vlaneseq
        %v2026 = vshrl.u32 %v2025, 7
        %v2027 = vsub.s32 0, %v2026
        %v2028 = vrot.slane %v2007, %v2027
        %v2030 = vmul.f32 %v2023, %v2028
        %v2032 = vlaneseq
        %v2033 = vshrl.u32 %v2032, 7
        %v2034 = vsub.s32 0, %v2033
        %v2035 = vrot.slane %v2008, %v2034
        %v2037 = vadd.f32 %v2030, %v2035
        %2038 = vst.msk [vmem:[%s472] sm:$0xff] %vm985, %v2037
        %s2039 = sand.u32 %s349, 1
        %s2040 = scalar_lea.sflag [#allocation5], %s2039
        %s2041 = sand.u32 %s349, 1
        %s2042 = smul.addr %s2041, 8
        %s2043 = scalar_lea.vmem [#allocation4], %s2042
        // Predicated region
        $region81: #{tpu_custom_call.1} parent=75 // pred_check
          %p2044 = pneg %p359
        $region82: #{tpu_custom_call.1} parent=75 // pred_check_branch
          %2046 = sbr.rel (%p2044) target = $region84
        $region83: #{tpu_custom_call.1} parent=75 // pred_region
          %s2048 = ssub.s32 128, 128
          %2049 = vsyncadd %s2040, %s2048
          %s2050 = sadd.s32 %s33, %s32
          %s2051 = smul.addr %s2050, 128
          %s2052 = scalar_lea.hbm %s14, %s2051
          %s2054 = sshll.u32 %s2043, 4
          %s2055 = int_to_ptr.vmem [resolvable:$true] %s2054
          %2057 = dma.vmem_to_hbm [thread:$0]  %s2055, 128, %s2052, %s2040
        $region84: #{tpu_custom_call.1} parent=75 // pred_fallthru
          _
      $region76: #{tpu_custom_call.1} parent=5 // pred_fallthru
        _
      %p2058 = scmp.le.s32.totalorder 2, %s23
      // Predicated region
      $region85: #{tpu_custom_call.1} parent=5 // pred_check
        %p2059 = pneg %p2058
      $region86: #{tpu_custom_call.1} parent=5 // pred_check_branch
        %2061 = sbr.rel (%p2059) target = $region88
      $region87: #{tpu_custom_call.1} parent=5 // pred_region
        %s2062 = ssub.s32 %s23, 2
        // Predicated region
        $region89: #{tpu_custom_call.1} parent=87 // pred_check
          %p2063 = pneg %p365
        $region90: #{tpu_custom_call.1} parent=87 // pred_check_branch
          %2065 = sbr.rel (%p2063) target = $region92
        $region91: #{tpu_custom_call.1} parent=87 // pred_region
          %s2066 = sand.u32 %s350, 1
          %s2067 = scalar_lea.sflag [#allocation5], %s2066
          %s2068 = sand.u32 %s350, 1
          %s2069 = smul.addr %s2068, 8
          %s2070 = scalar_lea.vmem [#allocation4], %s2069
          %2071 = dma.done %s2067, 128
        $region92: #{tpu_custom_call.1} parent=87 // pred_fallthru
          _
      $region88: #{tpu_custom_call.1} parent=5 // pred_fallthru
        _
    $region6: #{tpu_custom_call.1} parent=1 // loop_footer
      %s27 = sadd.s32 1, %s23
    $region7: #{tpu_custom_call.1} parent=1 // loop_footer_branch
      %22 = sbr.rel target = $region3
    $region8: #{tpu_custom_call.1} parent=1 // loop_exit
      _
    %2072 = vsyncpa [#allocation5], 1
    %s2073 = scalar_lea.sflag [#allocation5], 1
    %2074 = vsyncpa %s2073, 1

</llo_original>
